<compile_context>
chip_gen: v6e
topology: v6e:2x2x1
jax: 0.10.0
libtpu: 0.0.40
codegen_flags: <defaults>
</compile_context>

<pallas_src>
import jax
import jax.numpy as jnp
from jax import lax
from jax.experimental import pallas as pl
from jax.experimental.pallas import tpu as pltpu

SHRINK_THRES = 0.0025
EPS = 1e-12
_NEG_LARGE = -1e30                    # finite "minus infinity" (avoids inf-inf NaNs)
_VMEM_LIMIT = 32 * 1024 * 1024        # safe scoped-VMEM budget on v5e/v6e/v7x
_NT_DIMS = (((1,), (1,)), ((), ()))   # contract last dims of both operands (a @ b.T)


def _cdiv(a, b):
    return (a + b - 1) // b


def _round_up(a, b):
    return _cdiv(a, b) * b


# ---------------------------------------------------------------------------
# In-kernel helpers (traced inside the Pallas bodies)
# ---------------------------------------------------------------------------
def _l2_normalize_rows(x):
    # F.normalize(x, p=2, dim=1): x / max(||x||_2, 1e-12)
    norm = jnp.sqrt(jnp.sum(x * x, axis=-1, keepdims=True))
    return x / jnp.maximum(norm, EPS)


def _attn_postprocess(logits):
    # softmax(last dim) -> hard_shrink_relu -> L1 renorm(last dim). Exact divides.
    m = jnp.max(logits, axis=-1, keepdims=True)
    e = jnp.exp(logits - m)
    p = e / jnp.sum(e, axis=-1, keepdims=True)
    shifted = p - SHRINK_THRES
    shrunk = jax.nn.relu(shifted) * p / (jnp.abs(shifted) + EPS)
    l1 = jnp.sum(jnp.abs(shrunk), axis=-1, keepdims=True)
    return shrunk / jnp.maximum(l1, EPS)


# ---------------------------------------------------------------------------
# Kernels
# ---------------------------------------------------------------------------
def _make_update_kernel(t_true, tu, needs_mask):
    """MemoryModule.update(query) as a two-pass, T-tiled kernel.

    grid = (2, nt): axis 0 is the pass, axis 1 the T tile.
      pass 0: online max / sum-exp of (mem @ qn^T) over T (softmax normalizers)
      pass 1: p -> hard_shrink -> accumulate sum|shrunk| and shrunk @ qn
      last step of pass 1: L1 renorm, gate = sigmoid(U(mem)+W(add_mem)), new mem.
    """

    def kernel(mem_ref, q_ref, uw_ref, ub_ref, ww_ref, wb_ref,
               new_mem_ref, m_scr, l_scr, s1_scr, acc_scr):
        phase = pl.program_id(0)
        t = pl.program_id(1)
        nt = pl.num_programs(1)

        mem = mem_ref[...].astype(jnp.float32)                       # (M, C)
        q = q_ref[...].astype(jnp.float32)                           # (tu, C)
        if needs_mask:
            rows = lax.broadcasted_iota(jnp.int32, (tu, 1), 0) + t * tu
            q = jnp.where(rows < t_true, q, 0.0)
        qn = _l2_normalize_rows(q)                                   # (tu, C)
        logits = lax.dot_general(mem, qn, _NT_DIMS,
                                 preferred_element_type=jnp.float32)  # (M, tu)
        if needs_mask:
            cols = lax.broadcasted_iota(jnp.int32, (1, tu), 1) + t * tu
            logits = jnp.where(cols < t_true, logits, _NEG_LARGE)

        @pl.when(jnp.logical_and(phase == 0, t == 0))
        def _():
            m_scr[...] = jnp.full_like(m_scr, _NEG_LARGE)
            l_scr[...] = jnp.zeros_like(l_scr)

        @pl.when(phase == 0)
        def _():
            m_prev = m_scr[...]
            m_new = jnp.maximum(m_prev, jnp.max(logits, axis=-1, keepdims=True))
            l_scr[...] = (l_scr[...] * jnp.exp(m_prev - m_new)
                          + jnp.sum(jnp.exp(logits - m_new), axis=-1, keepdims=True))
            m_scr[...] = m_new

        @pl.when(jnp.logical_and(phase == 1, t == 0))
        def _():
            s1_scr[...] = jnp.zeros_like(s1_scr)
            acc_scr[...] = jnp.zeros_like(acc_scr)

        @pl.when(phase == 1)
        def _():
            p = jnp.exp(logits - m_scr[...]) / l_scr[...]            # softmax over T
            shifted = p - SHRINK_THRES
            shrunk = jax.nn.relu(shifted) * p / (jnp.abs(shifted) + EPS)
            s1_scr[...] += jnp.sum(jnp.abs(shrunk), axis=-1, keepdims=True)
            acc_scr[...] += jnp.dot(shrunk, qn, preferred_element_type=jnp.float32)

        @pl.when(jnp.logical_and(phase == 1, t == nt - 1))
        def _():
            add_mem = acc_scr[...] / jnp.maximum(s1_scr[...], EPS)   # L1 renorm folded in
            u = lax.dot_general(mem, uw_ref[...], _NT_DIMS,
                                preferred_element_type=jnp.float32) + ub_ref[...]
            w = lax.dot_general(add_mem, ww_ref[...], _NT_DIMS,
                                preferred_element_type=jnp.float32) + wb_ref[...]
            gate = jax.nn.sigmoid(u + w)
            new_mem_ref[...] = (1.0 - gate) * mem + gate * add_mem

    return kernel


def _make_read_kernel(C):
    """MemoryModule.read(query) for one tile of T rows, concat fused into output."""

    def kernel(q_ref, mem_ref, out_ref, attn_ref):
        mem = mem_ref[...].astype(jnp.float32)                       # (M, C) resident
        qn = _l2_normalize_rows(q_ref[...].astype(jnp.float32))      # (tq, C)
        logits = lax.dot_general(qn, mem, _NT_DIMS,
                                 preferred_element_type=jnp.float32)  # (tq, M)
        attn = _attn_postprocess(logits)
        add_memory = jnp.dot(attn, mem, preferred_element_type=jnp.float32)  # (tq, C)
        # read_query = cat((query_normalized, add_memory), dim=1) — fused here.
        out_ref[:, :C] = qn
        out_ref[:, C:] = add_memory
        attn_ref[...] = attn

    return kernel


# ---------------------------------------------------------------------------
# Wrapper (mirrors the PyTorch view()/forward() glue)
# ---------------------------------------------------------------------------
def memory_module_forward(query, mem, U_w, U_b, W_w, W_b, phase_type=None):
    s = query.shape
    ndim = len(s)
    if ndim not in (2, 3):
        raise TypeError("Wrong input dimension")
    C = s[-1]
    M = mem.shape[0]

    q = query.reshape(-1, C)                 # keep caller dtype; cast inside kernels
    mem = mem.astype(jnp.float32)
    T = q.shape[0]

    # Pad T to a sublane multiple so every BlockSpec is (8, *)-aligned.
    T_pad = max(8, _round_up(T, 8))
    if T_pad != T:
        q = jnp.pad(q, ((0, T_pad - T), (0, 0)))

    # ---- self.update(query): two-pass, T-tiled (skipped for phase_type=='test') ---
    if phase_type != "test":
        tu = min(2048, T_pad)
        nt = _cdiv(T_pad, tu)
        needs_mask = (nt * tu) != T          # padded / partial-tile columns to exclude
        mem = pl.pallas_call(
            _make_update_kernel(T, tu, needs_mask),
            out_shape=jax.ShapeDtypeStruct((M, C), jnp.float32),
            grid=(2, nt),                    # (pass, T tile)
            in_specs=[
                pl.BlockSpec((M, C), lambda p, t: (0, 0)),
                pl.BlockSpec((tu, C), lambda p, t: (t, 0)),
                pl.BlockSpec((C, C), lambda p, t: (0, 0)),
                pl.BlockSpec((1, C), lambda p, t: (0, 0)),
                pl.BlockSpec((C, C), lambda p, t: (0, 0)),
                pl.BlockSpec((1, C), lambda p, t: (0, 0)),
            ],
            out_specs=pl.BlockSpec((M, C), lambda p, t: (0, 0)),
            scratch_shapes=[
                pltpu.VMEM((M, 1), jnp.float32),   # running max over T
                pltpu.VMEM((M, 1), jnp.float32),   # running sum-exp over T
                pltpu.VMEM((M, 1), jnp.float32),   # sum |shrunk|
                pltpu.VMEM((M, C), jnp.float32),   # shrunk @ qn accumulator
            ],
            compiler_params=pltpu.CompilerParams(
                dimension_semantics=("arbitrary", "arbitrary"),
                vmem_limit_bytes=_VMEM_LIMIT,
            ),
        )(mem, q,
          U_w.astype(jnp.float32), U_b.reshape(1, C).astype(jnp.float32),
          W_w.astype(jnp.float32), W_b.reshape(1, C).astype(jnp.float32))

    # ---- self.read(query): tiled over T, >=2 tiles for v7x megacore, concat fused ---
    tq = min(4096, max(8, _round_up(_cdiv(T_pad, 2), 8)))
    grid = (_cdiv(T_pad, tq),)
    read_out, attn = pl.pallas_call(
        _make_read_kernel(C),
        out_shape=(
            jax.ShapeDtypeStruct((T_pad, 2 * C), jnp.float32),
            jax.ShapeDtypeStruct((T_pad, M), jnp.float32),
        ),
        grid=grid,
        in_specs=[
            pl.BlockSpec((tq, C), lambda i: (i, 0)),
            pl.BlockSpec((M, C), lambda i: (0, 0)),        # small, stays resident
        ],
        out_specs=(
            pl.BlockSpec((tq, 2 * C), lambda i: (i, 0)),
            pl.BlockSpec((tq, M), lambda i: (i, 0)),
        ),
        compiler_params=pltpu.CompilerParams(
            dimension_semantics=("parallel",),             # shard tiles across TCs
            vmem_limit_bytes=_VMEM_LIMIT,
        ),
    )(q, mem)

    if T_pad != T:
        read_out = read_out[:T]
        attn = attn[:T]

    if ndim == 3:
        read_out = read_out.reshape(s[0], s[1], 2 * C)
        attn = attn.reshape(s[0], s[1], M)

    return {"output": read_out, "attn": attn, "memory_init_embedding": mem}


# ---------------------------------------------------------------------------
# Pure-JAX reference (mirrors the PyTorch module exactly) for self-check
# ---------------------------------------------------------------------------
def reference_forward(query, mem, U_w, U_b, W_w, W_b, phase_type=None):
    s = query.shape
    C = s[-1]
    M = mem.shape[0]
    q = query.reshape(-1, C).astype(jnp.float32)
    q = q / jnp.maximum(jnp.linalg.norm(q, axis=1, keepdims=True), EPS)

    def attn_post(logits):
        p = jax.nn.softmax(logits, axis=-1)
        shr = jax.nn.relu(p - SHRINK_THRES) * p / (jnp.abs(p - SHRINK_THRES) + EPS)
        return shr / jnp.maximum(jnp.sum(jnp.abs(shr), axis=1, keepdims=True), EPS)

    mem = mem.astype(jnp.float32)
    if phase_type != "test":
        attn_u = attn_post(mem @ q.T)
        add_mem = attn_u @ q
        gate = jax.nn.sigmoid(mem @ U_w.T + U_b + add_mem @ W_w.T + W_b)
        mem = (1.0 - gate) * mem + gate * add_mem

    attn = attn_post(q @ mem.T)
    add_memory = attn @ mem
    out = jnp.concatenate([q, add_memory], axis=1)
    if len(s) == 3:
        out = out.reshape(s[0], s[1], 2 * C)
        attn = attn.reshape(s[0], s[1], M)
    return {"output": out, "attn": attn, "memory_init_embedding": mem}


# ---------------------------------------------------------------------------
# Driver
# ---------------------------------------------------------------------------
if __name__ == "__main__":
    key = jax.random.PRNGKey(0)
    N, L, C, M = 2, 8, 32, 10  # batch, seq, fea_dim, n_memory
    k1, k2, k3, k4, k5, k6, k7 = jax.random.split(key, 7)

    query = jax.random.normal(k1, (N, L, C), dtype=jnp.float32)

    # mem = F.normalize(torch.rand((M, C)), dim=1)
    mem0 = jax.random.uniform(k2, (M, C), dtype=jnp.float32)
    mem0 = mem0 / jnp.maximum(jnp.linalg.norm(mem0, axis=1, keepdims=True), EPS)

    # nn.Linear(C, C) default init: U(-1/sqrt(C), 1/sqrt(C))
    bound = 1.0 / float(C) ** 0.5
    U_w = jax.random.uniform(k3, (C, C), minval=-bound, maxval=bound, dtype=jnp.float32)
    U_b = jax.random.uniform(k4, (C,), minval=-bound, maxval=bound, dtype=jnp.float32)
    W_w = jax.random.uniform(k5, (C, C), minval=-bound, maxval=bound, dtype=jnp.float32)
    W_b = jax.random.uniform(k6, (C,), minval=-bound, maxval=bound, dtype=jnp.float32)

    fwd = jax.jit(memory_module_forward, static_argnames=("phase_type",))

    # ---- case 1: 3-D query, T divisible by 8 (multi-tile read, 2-phase update) ----
    out = jax.block_until_ready(fwd(query, mem0, U_w, U_b, W_w, W_b, phase_type=None))
    ref = reference_forward(query, mem0, U_w, U_b, W_w, W_b, phase_type=None)

    assert out["output"].shape == (N, L, 2 * C)
    assert out["attn"].shape == (N, L, M)
    assert out["memory_init_embedding"].shape == (M, C)
    for name in ("output", "attn", "memory_init_embedding"):
        assert bool(jnp.all(jnp.isfinite(out[name]))), name
        assert bool(jnp.allclose(out[name], ref[name], rtol=1e-2, atol=1e-3)), name

    # ---- case 2: 2-D query, T not a multiple of 8 (pad + mask path) ----
    query2 = jax.random.normal(k7, (10, C), dtype=jnp.float32)
    out2 = jax.block_until_ready(fwd(query2, mem0, U_w, U_b, W_w, W_b, phase_type=None))
    ref2 = reference_forward(query2, mem0, U_w, U_b, W_w, W_b, phase_type=None)
    assert out2["output"].shape == (10, 2 * C)
    assert out2["attn"].shape == (10, M)
    for name in ("output", "attn", "memory_init_embedding"):
        assert bool(jnp.all(jnp.isfinite(out2[name]))), name
        assert bool(jnp.allclose(out2[name], ref2[name], rtol=1e-2, atol=1e-3)), name

    print("KERNEL_OK")
</pallas_src>

<mosaic_0001>
module attributes {stable_mosaic.version = 11 : i64} {
  func.func @kernel(%arg0: i32, %arg1: memref<8x32xf32, #tpu.memory_space<vmem>>, %arg2: memref<10x32xf32, #tpu.memory_space<vmem>>, %arg3: memref<8x64xf32, #tpu.memory_space<vmem>>, %arg4: memref<8x10xf32, #tpu.memory_space<vmem>>) attributes {dimension_semantics = [#tpu.dimension_semantics<parallel>], iteration_bounds = array<i64: 2>, scalar_prefetch = 0 : i64, scratch_operands = 0 : i64, tpu.core_type = #tpu.core_type<tc>, window_params = [{transform_indices = @transform_0, window_bounds = array<i64: 8, 32>}, {pipeline_mode = #tpu.pipeline_mode<synchronous>, transform_indices = @transform_1, window_bounds = array<i64: 10, 32>}, {transform_indices = @transform_2, window_bounds = array<i64: 8, 64>}, {transform_indices = @transform_3, window_bounds = array<i64: 8, 10>}]} {
    %c0 = arith.constant 0 : index
    %c0_0 = arith.constant 0 : index
    %0 = vector.load %arg2[%c0, %c0_0] : memref<10x32xf32, #tpu.memory_space<vmem>>, vector<10x32xf32>
    %c0_1 = arith.constant 0 : index
    %c0_2 = arith.constant 0 : index
    %1 = vector.load %arg1[%c0_1, %c0_2] : memref<8x32xf32, #tpu.memory_space<vmem>>, vector<8x32xf32>
    %2 = arith.mulf %1, %1 : vector<8x32xf32>
    %cst = arith.constant dense<0.000000e+00> : vector<8xf32>
    %3 = vector.multi_reduction <add>, %2, %cst [1] : vector<8x32xf32> to vector<8xf32>
    %4 = vector.shape_cast %3 : vector<8xf32> to vector<8x1xf32>
    %5 = math.sqrt %4 : vector<8x1xf32>
    %cst_3 = arith.constant 9.99999996E-13 : f32
    %6 = vector.broadcast %cst_3 : f32 to vector<8x1xf32>
    %7 = arith.maximumf %5, %6 : vector<8x1xf32>
    %8 = vector.broadcast %7 : vector<8x1xf32> to vector<8x32xf32>
    %9 = arith.divf %1, %8 : vector<8x32xf32>
    %cst_4 = arith.constant dense<0.000000e+00> : vector<8x10xf32>
    %10 = tpu.matmul %9, %0, %cst_4 {dimension_numbers = #tpu.dot_dimension_numbers<[1], [1], [0], [0], [0, 0, 1, 0], [], []>} : vector<8x32xf32>, vector<10x32xf32>, vector<8x10xf32> -> vector<8x10xf32>
    %cst_5 = arith.constant dense<0xFF800000> : vector<8xf32>
    %11 = vector.multi_reduction <maximumf>, %10, %cst_5 [1] : vector<8x10xf32> to vector<8xf32>
    %12 = vector.shape_cast %11 : vector<8xf32> to vector<8x1xf32>
    %13 = vector.broadcast %12 : vector<8x1xf32> to vector<8x10xf32>
    %14 = arith.subf %10, %13 : vector<8x10xf32>
    %15 = math.exp %14 : vector<8x10xf32>
    %cst_6 = arith.constant dense<0.000000e+00> : vector<8xf32>
    %16 = vector.multi_reduction <add>, %15, %cst_6 [1] : vector<8x10xf32> to vector<8xf32>
    %17 = vector.shape_cast %16 : vector<8xf32> to vector<8x1xf32>
    %18 = vector.broadcast %17 : vector<8x1xf32> to vector<8x10xf32>
    %19 = arith.divf %15, %18 : vector<8x10xf32>
    %cst_7 = arith.constant 2.500000e-03 : f32
    %20 = vector.broadcast %cst_7 : f32 to vector<8x10xf32>
    %21 = arith.subf %19, %20 : vector<8x10xf32>
    %cst_8 = arith.constant 0.000000e+00 : f32
    %22 = vector.broadcast %cst_8 : f32 to vector<8x10xf32>
    %23 = arith.maximumf %21, %22 : vector<8x10xf32>
    %24 = arith.mulf %23, %19 : vector<8x10xf32>
    %25 = math.absf %21 : vector<8x10xf32>
    %cst_9 = arith.constant 9.99999996E-13 : f32
    %26 = vector.broadcast %cst_9 : f32 to vector<8x10xf32>
    %27 = arith.addf %25, %26 : vector<8x10xf32>
    %28 = arith.divf %24, %27 : vector<8x10xf32>
    %29 = math.absf %28 : vector<8x10xf32>
    %cst_10 = arith.constant dense<0.000000e+00> : vector<8xf32>
    %30 = vector.multi_reduction <add>, %29, %cst_10 [1] : vector<8x10xf32> to vector<8xf32>
    %31 = vector.shape_cast %30 : vector<8xf32> to vector<8x1xf32>
    %cst_11 = arith.constant 9.99999996E-13 : f32
    %32 = vector.broadcast %cst_11 : f32 to vector<8x1xf32>
    %33 = arith.maximumf %31, %32 : vector<8x1xf32>
    %34 = vector.broadcast %33 : vector<8x1xf32> to vector<8x10xf32>
    %35 = arith.divf %28, %34 : vector<8x10xf32>
    %cst_12 = arith.constant dense<0.000000e+00> : vector<8x32xf32>
    %36 = tpu.matmul %35, %0, %cst_12 {dimension_numbers = #tpu.dot_dimension_numbers<[1], [0], [0], [1], [0, 0, 1, 1], [], []>} : vector<8x10xf32>, vector<10x32xf32>, vector<8x32xf32> -> vector<8x32xf32>
    %c0_13 = arith.constant 0 : index
    %c0_14 = arith.constant 0 : index
    %37 = vector.load %arg3[%c0_13, %c0_14] : memref<8x64xf32, #tpu.memory_space<vmem>>, vector<8x32xf32>
    tpu.vector_store %arg3[%c0_13, %c0_14], %9 {strides = array<i32>} : memref<8x64xf32, #tpu.memory_space<vmem>>, vector<8x32xf32>,
    %c0_15 = arith.constant 0 : index
    %c32 = arith.constant 32 : index
    %38 = vector.load %arg3[%c0_15, %c32] : memref<8x64xf32, #tpu.memory_space<vmem>>, vector<8x32xf32>
    tpu.vector_store %arg3[%c0_15, %c32], %36 {strides = array<i32>} : memref<8x64xf32, #tpu.memory_space<vmem>>, vector<8x32xf32>,
    %c0_16 = arith.constant 0 : index
    %c0_17 = arith.constant 0 : index
    %39 = vector.load %arg4[%c0_16, %c0_17] : memref<8x10xf32, #tpu.memory_space<vmem>>, vector<8x10xf32>
    tpu.vector_store %arg4[%c0_16, %c0_17], %35 {strides = array<i32>} : memref<8x10xf32, #tpu.memory_space<vmem>>, vector<8x10xf32>,
    return
  }
  func.func @transform_0(%arg0: i32) -> (i32, i32) {
    %c0_i32 = arith.constant 0 : i32
    %c0_i32_0 = arith.constant 0 : i32
    return %arg0, %c0_i32 : i32, i32
  }
  func.func @transform_1(%arg0: i32) -> (i32, i32) {
    %c0_i32 = arith.constant 0 : i32
    %c0_i32_0 = arith.constant 0 : i32
    %c0_i32_1 = arith.constant 0 : i32
    return %c0_i32, %c0_i32_0 : i32, i32
  }
  func.func @transform_2(%arg0: i32) -> (i32, i32) {
    %c0_i32 = arith.constant 0 : i32
    %c0_i32_0 = arith.constant 0 : i32
    return %arg0, %c0_i32 : i32, i32
  }
  func.func @transform_3(%arg0: i32) -> (i32, i32) {
    %c0_i32 = arith.constant 0 : i32
    %c0_i32_0 = arith.constant 0 : i32
    return %arg0, %c0_i32 : i32, i32
  }
}

module attributes {stable_mosaic.version = 11 : i64} {
  func.func @kernel(%arg0: i32, %arg1: i32, %arg2: memref<10x32xf32, #tpu.memory_space<vmem>>, %arg3: memref<16x32xf32, #tpu.memory_space<vmem>>, %arg4: memref<32x32xf32, #tpu.memory_space<vmem>>, %arg5: memref<1x32xf32, #tpu.memory_space<vmem>>, %arg6: memref<32x32xf32, #tpu.memory_space<vmem>>, %arg7: memref<1x32xf32, #tpu.memory_space<vmem>>, %arg8: memref<10x32xf32, #tpu.memory_space<vmem>>, %arg9: memref<10x1xf32, #tpu.memory_space<vmem>>, %arg10: memref<10x1xf32, #tpu.memory_space<vmem>>, %arg11: memref<10x1xf32, #tpu.memory_space<vmem>>, %arg12: memref<10x32xf32, #tpu.memory_space<vmem>>) attributes {dimension_semantics = [#tpu.dimension_semantics<arbitrary>, #tpu.dimension_semantics<arbitrary>], iteration_bounds = array<i64: 2, 1>, scalar_prefetch = 0 : i64, scratch_operands = 4 : i64, tpu.core_type = #tpu.core_type<tc>, window_params = [{pipeline_mode = #tpu.pipeline_mode<synchronous>, transform_indices = @transform_0, window_bounds = array<i64: 10, 32>}, {transform_indices = @transform_1, window_bounds = array<i64: 16, 32>}, {pipeline_mode = #tpu.pipeline_mode<synchronous>, transform_indices = @transform_2, window_bounds = array<i64: 32, 32>}, {pipeline_mode = #tpu.pipeline_mode<synchronous>, transform_indices = @transform_3, window_bounds = array<i64: 1, 32>}, {pipeline_mode = #tpu.pipeline_mode<synchronous>, transform_indices = @transform_4, window_bounds = array<i64: 32, 32>}, {pipeline_mode = #tpu.pipeline_mode<synchronous>, transform_indices = @transform_5, window_bounds = array<i64: 1, 32>}, {pipeline_mode = #tpu.pipeline_mode<synchronous>, transform_indices = @transform_6, window_bounds = array<i64: 10, 32>}]} {
    %c0 = arith.constant 0 : index
    %c0_0 = arith.constant 0 : index
    %0 = vector.load %arg2[%c0, %c0_0] : memref<10x32xf32, #tpu.memory_space<vmem>>, vector<10x32xf32>
    %c0_1 = arith.constant 0 : index
    %c0_2 = arith.constant 0 : index
    %1 = vector.load %arg3[%c0_1, %c0_2] : memref<16x32xf32, #tpu.memory_space<vmem>>, vector<16x32xf32>
    %2 = arith.mulf %1, %1 : vector<16x32xf32>
    %cst = arith.constant dense<0.000000e+00> : vector<16xf32>
    %3 = vector.multi_reduction <add>, %2, %cst [1] : vector<16x32xf32> to vector<16xf32>
    %4 = vector.shape_cast %3 : vector<16xf32> to vector<16x1xf32>
    %5 = math.sqrt %4 : vector<16x1xf32>
    %cst_3 = arith.constant 9.99999996E-13 : f32
    %6 = vector.broadcast %cst_3 : f32 to vector<16x1xf32>
    %7 = arith.maximumf %5, %6 : vector<16x1xf32>
    %8 = vector.broadcast %7 : vector<16x1xf32> to vector<16x32xf32>
    %9 = arith.divf %1, %8 : vector<16x32xf32>
    %cst_4 = arith.constant dense<0.000000e+00> : vector<10x16xf32>
    %10 = tpu.matmul %0, %9, %cst_4 {dimension_numbers = #tpu.dot_dimension_numbers<[1], [1], [0], [0], [0, 0, 1, 0], [], []>} : vector<10x32xf32>, vector<16x32xf32>, vector<10x16xf32> -> vector<10x16xf32>
    %c0_i32 = arith.constant 0 : i32
    %11 = arith.cmpi eq, %arg0, %c0_i32 : i32
    %c0_i32_5 = arith.constant 0 : i32
    %12 = arith.cmpi eq, %arg1, %c0_i32_5 : i32
    %13 = arith.andi %11, %12 : i1
    %14 = arith.extui %13 : i1 to i32
    %c0_i32_6 = arith.constant 0 : i32
    %15 = arith.cmpi ne, %14, %c0_i32_6 : i32
    scf.if %15 {
      %cst_16 = arith.constant -1.000000e+30 : f32
      %32 = vector.broadcast %cst_16 : f32 to vector<10x1xf32>
      %c0_17 = arith.constant 0 : index
      %c0_18 = arith.constant 0 : index
      %33 = vector.load %arg9[%c0_17, %c0_18] : memref<10x1xf32, #tpu.memory_space<vmem>>, vector<10x1xf32>
      tpu.vector_store %arg9[%c0_17, %c0_18], %32 {strides = array<i32>} : memref<10x1xf32, #tpu.memory_space<vmem>>, vector<10x1xf32>,
      %cst_19 = arith.constant 0.000000e+00 : f32
      %34 = vector.broadcast %cst_19 : f32 to vector<10x1xf32>
      %c0_20 = arith.constant 0 : index
      %c0_21 = arith.constant 0 : index
      %35 = vector.load %arg10[%c0_20, %c0_21] : memref<10x1xf32, #tpu.memory_space<vmem>>, vector<10x1xf32>
      tpu.vector_store %arg10[%c0_20, %c0_21], %34 {strides = array<i32>} : memref<10x1xf32, #tpu.memory_space<vmem>>, vector<10x1xf32>,
    } else {
    }
    %c0_i32_7 = arith.constant 0 : i32
    %16 = arith.cmpi eq, %arg0, %c0_i32_7 : i32
    %17 = arith.extui %16 : i1 to i32
    %c0_i32_8 = arith.constant 0 : i32
    %18 = arith.cmpi ne, %17, %c0_i32_8 : i32
    scf.if %18 {
      %c0_16 = arith.constant 0 : index
      %c0_17 = arith.constant 0 : index
      %32 = vector.load %arg9[%c0_16, %c0_17] : memref<10x1xf32, #tpu.memory_space<vmem>>, vector<10x1xf32>
      %cst_18 = arith.constant dense<0xFF800000> : vector<10xf32>
      %33 = vector.multi_reduction <maximumf>, %10, %cst_18 [1] : vector<10x16xf32> to vector<10xf32>
      %34 = vector.shape_cast %33 : vector<10xf32> to vector<10x1xf32>
      %35 = arith.maximumf %32, %34 : vector<10x1xf32>
      %c0_19 = arith.constant 0 : index
      %c0_20 = arith.constant 0 : index
      %36 = vector.load %arg10[%c0_19, %c0_20] : memref<10x1xf32, #tpu.memory_space<vmem>>, vector<10x1xf32>
      %37 = arith.subf %32, %35 : vector<10x1xf32>
      %38 = math.exp %37 : vector<10x1xf32>
      %39 = arith.mulf %36, %38 : vector<10x1xf32>
      %40 = vector.broadcast %35 : vector<10x1xf32> to vector<10x16xf32>
      %41 = arith.subf %10, %40 : vector<10x16xf32>
      %42 = math.exp %41 : vector<10x16xf32>
      %cst_21 = arith.constant dense<0.000000e+00> : vector<10xf32>
      %43 = vector.multi_reduction <add>, %42, %cst_21 [1] : vector<10x16xf32> to vector<10xf32>
      %44 = vector.shape_cast %43 : vector<10xf32> to vector<10x1xf32>
      %45 = arith.addf %39, %44 : vector<10x1xf32>
      %c0_22 = arith.constant 0 : index
      %c0_23 = arith.constant 0 : index
      %46 = vector.load %arg10[%c0_22, %c0_23] : memref<10x1xf32, #tpu.memory_space<vmem>>, vector<10x1xf32>
      tpu.vector_store %arg10[%c0_22, %c0_23], %45 {strides = array<i32>} : memref<10x1xf32, #tpu.memory_space<vmem>>, vector<10x1xf32>,
      %c0_24 = arith.constant 0 : index
      %c0_25 = arith.constant 0 : index
      %47 = vector.load %arg9[%c0_24, %c0_25] : memref<10x1xf32, #tpu.memory_space<vmem>>, vector<10x1xf32>
      tpu.vector_store %arg9[%c0_24, %c0_25], %35 {strides = array<i32>} : memref<10x1xf32, #tpu.memory_space<vmem>>, vector<10x1xf32>,
    } else {
    }
    %c1_i32 = arith.constant 1 : i32
    %19 = arith.cmpi eq, %arg0, %c1_i32 : i32
    %c0_i32_9 = arith.constant 0 : i32
    %20 = arith.cmpi eq, %arg1, %c0_i32_9 : i32
    %21 = arith.andi %19, %20 : i1
    %22 = arith.extui %21 : i1 to i32
    %c0_i32_10 = arith.constant 0 : i32
    %23 = arith.cmpi ne, %22, %c0_i32_10 : i32
    scf.if %23 {
      %cst_16 = arith.constant 0.000000e+00 : f32
      %32 = vector.broadcast %cst_16 : f32 to vector<10x1xf32>
      %c0_17 = arith.constant 0 : index
      %c0_18 = arith.constant 0 : index
      %33 = vector.load %arg11[%c0_17, %c0_18] : memref<10x1xf32, #tpu.memory_space<vmem>>, vector<10x1xf32>
      tpu.vector_store %arg11[%c0_17, %c0_18], %32 {strides = array<i32>} : memref<10x1xf32, #tpu.memory_space<vmem>>, vector<10x1xf32>,
      %cst_19 = arith.constant 0.000000e+00 : f32
      %34 = vector.broadcast %cst_19 : f32 to vector<10x32xf32>
      %c0_20 = arith.constant 0 : index
      %c0_21 = arith.constant 0 : index
      %35 = vector.load %arg12[%c0_20, %c0_21] : memref<10x32xf32, #tpu.memory_space<vmem>>, vector<10x32xf32>
      tpu.vector_store %arg12[%c0_20, %c0_21], %34 {strides = array<i32>} : memref<10x32xf32, #tpu.memory_space<vmem>>, vector<10x32xf32>,
    } else {
    }
    %c1_i32_11 = arith.constant 1 : i32
    %24 = arith.cmpi eq, %arg0, %c1_i32_11 : i32
    %25 = arith.extui %24 : i1 to i32
    %c0_i32_12 = arith.constant 0 : i32
    %26 = arith.cmpi ne, %25, %c0_i32_12 : i32
    scf.if %26 {
      %c0_16 = arith.constant 0 : index
      %c0_17 = arith.constant 0 : index
      %32 = vector.load %arg9[%c0_16, %c0_17] : memref<10x1xf32, #tpu.memory_space<vmem>>, vector<10x1xf32>
      %33 = vector.broadcast %32 : vector<10x1xf32> to vector<10x16xf32>
      %34 = arith.subf %10, %33 : vector<10x16xf32>
      %35 = math.exp %34 : vector<10x16xf32>
      %c0_18 = arith.constant 0 : index
      %c0_19 = arith.constant 0 : index
      %36 = vector.load %arg10[%c0_18, %c0_19] : memref<10x1xf32, #tpu.memory_space<vmem>>, vector<10x1xf32>
      %37 = vector.broadcast %36 : vector<10x1xf32> to vector<10x16xf32>
      %38 = arith.divf %35, %37 : vector<10x16xf32>
      %cst_20 = arith.constant 2.500000e-03 : f32
      %39 = vector.broadcast %cst_20 : f32 to vector<10x16xf32>
      %40 = arith.subf %38, %39 : vector<10x16xf32>
      %cst_21 = arith.constant 0.000000e+00 : f32
      %41 = vector.broadcast %cst_21 : f32 to vector<10x16xf32>
      %42 = arith.maximumf %40, %41 : vector<10x16xf32>
      %43 = arith.mulf %42, %38 : vector<10x16xf32>
      %44 = math.absf %40 : vector<10x16xf32>
      %cst_22 = arith.constant 9.99999996E-13 : f32
      %45 = vector.broadcast %cst_22 : f32 to vector<10x16xf32>
      %46 = arith.addf %44, %45 : vector<10x16xf32>
      %47 = arith.divf %43, %46 : vector<10x16xf32>
      %c0_23 = arith.constant 0 : index
      %c0_24 = arith.constant 0 : index
      %48 = vector.load %arg11[%c0_23, %c0_24] : memref<10x1xf32, #tpu.memory_space<vmem>>, vector<10x1xf32>
      %49 = math.absf %47 : vector<10x16xf32>
      %cst_25 = arith.constant dense<0.000000e+00> : vector<10xf32>
      %50 = vector.multi_reduction <add>, %49, %cst_25 [1] : vector<10x16xf32> to vector<10xf32>
      %51 = vector.shape_cast %50 : vector<10xf32> to vector<10x1xf32>
      %52 = arith.addf %48, %51 : vector<10x1xf32>
      %c0_26 = arith.constant 0 : index
      %c0_27 = arith.constant 0 : index
      %53 = vector.load %arg11[%c0_26, %c0_27] : memref<10x1xf32, #tpu.memory_space<vmem>>, vector<10x1xf32>
      tpu.vector_store %arg11[%c0_26, %c0_27], %52 {strides = array<i32>} : memref<10x1xf32, #tpu.memory_space<vmem>>, vector<10x1xf32>,
      %c0_28 = arith.constant 0 : index
      %c0_29 = arith.constant 0 : index
      %54 = vector.load %arg12[%c0_28, %c0_29] : memref<10x32xf32, #tpu.memory_space<vmem>>, vector<10x32xf32>
      %cst_30 = arith.constant dense<0.000000e+00> : vector<10x32xf32>
      %55 = tpu.matmul %47, %9, %cst_30 {dimension_numbers = #tpu.dot_dimension_numbers<[1], [0], [0], [1], [0, 0, 1, 1], [], []>} : vector<10x16xf32>, vector<16x32xf32>, vector<10x32xf32> -> vector<10x32xf32>
      %56 = arith.addf %54, %55 : vector<10x32xf32>
      %c0_31 = arith.constant 0 : index
      %c0_32 = arith.constant 0 : index
      %57 = vector.load %arg12[%c0_31, %c0_32] : memref<10x32xf32, #tpu.memory_space<vmem>>, vector<10x32xf32>
      tpu.vector_store %arg12[%c0_31, %c0_32], %56 {strides = array<i32>} : memref<10x32xf32, #tpu.memory_space<vmem>>, vector<10x32xf32>,
    } else {
    }
    %c1_i32_13 = arith.constant 1 : i32
    %27 = arith.cmpi eq, %arg0, %c1_i32_13 : i32
    %c0_i32_14 = arith.constant 0 : i32
    %28 = arith.cmpi eq, %arg1, %c0_i32_14 : i32
    %29 = arith.andi %27, %28 : i1
    %30 = arith.extui %29 : i1 to i32
    %c0_i32_15 = arith.constant 0 : i32
    %31 = arith.cmpi ne, %30, %c0_i32_15 : i32
    scf.if %31 {
      %c0_16 = arith.constant 0 : index
      %c0_17 = arith.constant 0 : index
      %32 = vector.load %arg12[%c0_16, %c0_17] : memref<10x32xf32, #tpu.memory_space<vmem>>, vector<10x32xf32>
      %c0_18 = arith.constant 0 : index
      %c0_19 = arith.constant 0 : index
      %33 = vector.load %arg11[%c0_18, %c0_19] : memref<10x1xf32, #tpu.memory_space<vmem>>, vector<10x1xf32>
      %cst_20 = arith.constant 9.99999996E-13 : f32
      %34 = vector.broadcast %cst_20 : f32 to vector<10x1xf32>
      %35 = arith.maximumf %33, %34 : vector<10x1xf32>
      %36 = vector.broadcast %35 : vector<10x1xf32> to vector<10x32xf32>
      %37 = arith.divf %32, %36 : vector<10x32xf32>
      %c0_21 = arith.constant 0 : index
      %c0_22 = arith.constant 0 : index
      %38 = vector.load %arg4[%c0_21, %c0_22] : memref<32x32xf32, #tpu.memory_space<vmem>>, vector<32x32xf32>
      %cst_23 = arith.constant dense<0.000000e+00> : vector<10x32xf32>
      %39 = tpu.matmul %0, %38, %cst_23 {dimension_numbers = #tpu.dot_dimension_numbers<[1], [1], [0], [0], [0, 0, 1, 0], [], []>} : vector<10x32xf32>, vector<32x32xf32>, vector<10x32xf32> -> vector<10x32xf32>
      %c0_24 = arith.constant 0 : index
      %c0_25 = arith.constant 0 : index
      %40 = vector.load %arg5[%c0_24, %c0_25] : memref<1x32xf32, #tpu.memory_space<vmem>>, vector<1x32xf32>
      %41 = vector.broadcast %40 : vector<1x32xf32> to vector<10x32xf32>
      %42 = arith.addf %39, %41 : vector<10x32xf32>
      %c0_26 = arith.constant 0 : index
      %c0_27 = arith.constant 0 : index
      %43 = vector.load %arg6[%c0_26, %c0_27] : memref<32x32xf32, #tpu.memory_space<vmem>>, vector<32x32xf32>
      %cst_28 = arith.constant dense<0.000000e+00> : vector<10x32xf32>
      %44 = tpu.matmul %37, %43, %cst_28 {dimension_numbers = #tpu.dot_dimension_numbers<[1], [1], [0], [0], [0, 0, 1, 0], [], []>} : vector<10x32xf32>, vector<32x32xf32>, vector<10x32xf32> -> vector<10x32xf32>
      %c0_29 = arith.constant 0 : index
      %c0_30 = arith.constant 0 : index
      %45 = vector.load %arg7[%c0_29, %c0_30] : memref<1x32xf32, #tpu.memory_space<vmem>>, vector<1x32xf32>
      %46 = vector.broadcast %45 : vector<1x32xf32> to vector<10x32xf32>
      %47 = arith.addf %44, %46 : vector<10x32xf32>
      %48 = arith.addf %42, %47 : vector<10x32xf32>
      %49 = arith.negf %48 : vector<10x32xf32>
      %50 = math.exp %49 : vector<10x32xf32>
      %cst_31 = arith.constant 1.000000e+00 : f32
      %51 = vector.broadcast %cst_31 : f32 to vector<10x32xf32>
      %52 = arith.addf %51, %50 : vector<10x32xf32>
      %53 = arith.divf %51, %52 : vector<10x32xf32>
      %cst_32 = arith.constant 1.000000e+00 : f32
      %54 = vector.broadcast %cst_32 : f32 to vector<10x32xf32>
      %55 = arith.subf %54, %53 : vector<10x32xf32>
      %56 = arith.mulf %55, %0 : vector<10x32xf32>
      %57 = arith.mulf %53, %37 : vector<10x32xf32>
      %58 = arith.addf %56, %57 : vector<10x32xf32>
      %c0_33 = arith.constant 0 : index
      %c0_34 = arith.constant 0 : index
      %59 = vector.load %arg8[%c0_33, %c0_34] : memref<10x32xf32, #tpu.memory_space<vmem>>, vector<10x32xf32>
      tpu.vector_store %arg8[%c0_33, %c0_34], %58 {strides = array<i32>} : memref<10x32xf32, #tpu.memory_space<vmem>>, vector<10x32xf32>,
    } else {
    }
    return
  }
  func.func @transform_0(%arg0: i32, %arg1: i32) -> (i32, i32) {
    %c0_i32 = arith.constant 0 : i32
    %c0_i32_0 = arith.constant 0 : i32
    %c0_i32_1 = arith.constant 0 : i32
    return %c0_i32, %c0_i32_0 : i32, i32
  }
  func.func @transform_1(%arg0: i32, %arg1: i32) -> (i32, i32) {
    %c0_i32 = arith.constant 0 : i32
    %c0_i32_0 = arith.constant 0 : i32
    return %arg1, %c0_i32 : i32, i32
  }
  func.func @transform_2(%arg0: i32, %arg1: i32) -> (i32, i32) {
    %c0_i32 = arith.constant 0 : i32
    %c0_i32_0 = arith.constant 0 : i32
    %c0_i32_1 = arith.constant 0 : i32
    return %c0_i32, %c0_i32_0 : i32, i32
  }
  func.func @transform_3(%arg0: i32, %arg1: i32) -> (i32, i32) {
    %c0_i32 = arith.constant 0 : i32
    %c0_i32_0 = arith.constant 0 : i32
    %c0_i32_1 = arith.constant 0 : i32
    return %c0_i32, %c0_i32_0 : i32, i32
  }
  func.func @transform_4(%arg0: i32, %arg1: i32) -> (i32, i32) {
    %c0_i32 = arith.constant 0 : i32
    %c0_i32_0 = arith.constant 0 : i32
    %c0_i32_1 = arith.constant 0 : i32
    return %c0_i32, %c0_i32_0 : i32, i32
  }
  func.func @transform_5(%arg0: i32, %arg1: i32) -> (i32, i32) {
    %c0_i32 = arith.constant 0 : i32
    %c0_i32_0 = arith.constant 0 : i32
    %c0_i32_1 = arith.constant 0 : i32
    return %c0_i32, %c0_i32_0 : i32, i32
  }
  func.func @transform_6(%arg0: i32, %arg1: i32) -> (i32, i32) {
    %c0_i32 = arith.constant 0 : i32
    %c0_i32_0 = arith.constant 0 : i32
    %c0_i32_1 = arith.constant 0 : i32
    return %c0_i32, %c0_i32_0 : i32, i32
  }
}

</mosaic_0001>

<llo_original>
// kernel: memory_module_forward.3
$region0: #{memory_module_forward.3}
  #allocation0 [shape = 'u32[]', space=smem, size = 0x4, offset = 0x4, fixed_abs, tag = 'smem constant byte address 0x4 - core index']
  #allocation1 [shape = 'u32[144,128]{1,0:T(1,128)}', space=vmem, size = 0x12000, scoped, tag = 'internal scratch']
  %s0 = inlined_call_operand.vmem [shape: f32[16,32], index: 0, kind: input, shape index: {}]
  %s1 = inlined_call_operand.vmem [shape: f32[10,32], index: 1, kind: input, shape index: {}]
  %s2 = inlined_call_operand.hbm [shape: f32[16,64], index: 2, kind: output, shape index: {0}]
  %s3 = inlined_call_operand.hbm [shape: f32[16,10], index: 3, kind: output, shape index: {1}]
  %4 = xla_tuple %s2, %s3
  %s5 = sld [smem:[#allocation0]]
  $region49: #{memory_module_forward.3} parent=0
    _
  %s7 = ssub.s32 1, %s5
  %s8 = scalar_select 0, %s7, %s5
  $region1: #{memory_module_forward.3} parent=0
    #allocation2 [shape = 'u8[8192]{0}', space=vmem, size = 0x2000, scoped, tag = 'output window, operand 0']
    #allocation3 [shape = 's32[2]{0}', space=sflag, size = 0x8, scoped, tag = 'scoped memory for memory_module_forward.3']
    #allocation4 [shape = 'u8[8192]{0}', space=vmem, size = 0x2000, scoped, tag = 'output window, operand 1']
    #allocation5 [shape = 's32[2]{0}', space=sflag, size = 0x8, scoped, tag = 'scoped memory for memory_module_forward.3']
    %9 = vsyncpa [#allocation3], 0
    %s10 = scalar_lea.sflag [#allocation3], 1
    %11 = vsyncpa %s10, 0
    %12 = vsyncpa [#allocation5], 0
    %s13 = scalar_lea.sflag [#allocation5], 1
    %14 = vsyncpa %s13, 0
    loop: start=0, step=1, limit=4
    $region2: #{memory_module_forward.3} parent=1 // loop_pre_header
      _
    $region3: #{memory_module_forward.3} parent=1 // loop_header
      %s16 = sphi 0, %s20
      %p17 = scmp.ge.s32.totalorder %s16, 4
      %s26 = sphi 0, %s28
      %s29 = sphi 0, %s26
      %s30 = sphi 0, %s29
      %s46 = sphi 0, %s30
      %s50 = sphi 0, %s50
      %s52 = sphi 0, %s50
      %s53 = sphi 0, %s52
      %s67 = sphi 0, %s53
      %s73 = sphi 0, %s75
      %s76 = sphi 0, %s73
      %s77 = sphi 0, %s76
      %s93 = sphi 0, %s77
      %s99 = sphi 0, %s101
      %s102 = sphi 0, %s99
      %s103 = sphi 0, %s102
      %s119 = sphi 0, %s103
    $region4: #{memory_module_forward.3} parent=1 // loop_header_branch
      %19 = sbr.rel (%p17) target = $region8
    $region5: #{memory_module_forward.3} parent=1 // loop_body
      %s21 = ssub.s32 %s16, 1
      %s22 = ssub.s32 %s16, 2
      %s23 = sadd.s32 %s16, 1
      %s24 = ssub.s32 %s16, %s23
      %p25 = scmp.eq.s32.totalorder %s24, 0
      %s27 = sadd.s32 %s26, 1
      %s28 = scalar_select %p25, %s26, %s27
      %p31 = pneg %p25
      %p32 = scmp.eq.s32.totalorder %s16, 1
      %p33 = por %p31, %p32
      %p34 = scmp.ne.s32.totalorder %s26, %s29
      %p35 = scmp.eq.s32.totalorder %s16, 0
      %p36 = por %p34, %p35
      %p37 = scmp.ne.s32.totalorder %s26, %s29
      %p38 = scmp.eq.s32.totalorder %s21, 1
      %p39 = por %p37, %p38
      %p40 = scmp.ne.s32.totalorder %s29, %s30
      %p41 = scmp.eq.s32.totalorder %s21, 0
      %p42 = por %p40, %p41
      %p43 = scmp.ne.s32.totalorder %s29, %s30
      %p44 = scmp.eq.s32.totalorder %s22, 1
      %p45 = por %p43, %p44
      %p47 = scmp.ne.s32.totalorder %s30, %s46
      %p48 = scmp.eq.s32.totalorder %s22, 0
      %p49 = por %p47, %p48
      %s51 = sadd.s32 %s50, 1
      %p54 = scmp.eq.s32.totalorder %s16, 1
      %p55 = scmp.ne.s32.totalorder %s50, %s52
      %p56 = scmp.eq.s32.totalorder %s16, 0
      %p57 = por %p55, %p56
      %p58 = scmp.ne.s32.totalorder %s50, %s52
      %p59 = scmp.eq.s32.totalorder %s21, 1
      %p60 = por %p58, %p59
      %p61 = scmp.ne.s32.totalorder %s52, %s53
      %p62 = scmp.eq.s32.totalorder %s21, 0
      %p63 = por %p61, %p62
      %p64 = scmp.ne.s32.totalorder %s52, %s53
      %p65 = scmp.eq.s32.totalorder %s22, 1
      %p66 = por %p64, %p65
      %p68 = scmp.ne.s32.totalorder %s53, %s67
      %p69 = scmp.eq.s32.totalorder %s22, 0
      %p70 = por %p68, %p69
      %s71 = ssub.s32 %s16, %s23
      %p72 = scmp.eq.s32.totalorder %s71, 0
      %s74 = sadd.s32 %s73, 1
      %s75 = scalar_select %p72, %s73, %s74
      %p78 = pneg %p72
      %p79 = scmp.eq.s32.totalorder %s16, 1
      %p80 = por %p78, %p79
      %p81 = scmp.ne.s32.totalorder %s73, %s76
      %p82 = scmp.eq.s32.totalorder %s16, 0
      %p83 = por %p81, %p82
      %p84 = scmp.ne.s32.totalorder %s73, %s76
      %p85 = scmp.eq.s32.totalorder %s21, 1
      %p86 = por %p84, %p85
      %p87 = scmp.ne.s32.totalorder %s76, %s77
      %p88 = scmp.eq.s32.totalorder %s21, 0
      %p89 = por %p87, %p88
      %p90 = scmp.ne.s32.totalorder %s76, %s77
      %p91 = scmp.eq.s32.totalorder %s22, 1
      %p92 = por %p90, %p91
      %p94 = scmp.ne.s32.totalorder %s77, %s93
      %p95 = scmp.eq.s32.totalorder %s22, 0
      %p96 = por %p94, %p95
      %s97 = ssub.s32 %s16, %s23
      %p98 = scmp.eq.s32.totalorder %s97, 0
      %s100 = sadd.s32 %s99, 1
      %s101 = scalar_select %p98, %s99, %s100
      %p104 = pneg %p98
      %p105 = scmp.eq.s32.totalorder %s16, 1
      %p106 = por %p104, %p105
      %p107 = scmp.ne.s32.totalorder %s99, %s102
      %p108 = scmp.eq.s32.totalorder %s16, 0
      %p109 = por %p107, %p108
      %p110 = scmp.ne.s32.totalorder %s99, %s102
      %p111 = scmp.eq.s32.totalorder %s21, 1
      %p112 = por %p110, %p111
      %p113 = scmp.ne.s32.totalorder %s102, %s103
      %p114 = scmp.eq.s32.totalorder %s21, 0
      %p115 = por %p113, %p114
      %p116 = scmp.ne.s32.totalorder %s102, %s103
      %p117 = scmp.eq.s32.totalorder %s22, 1
      %p118 = por %p116, %p117
      %p120 = scmp.ne.s32.totalorder %s103, %s119
      %p121 = scmp.eq.s32.totalorder %s22, 0
      %p122 = por %p120, %p121
      %p123 = scmp.le.s32.totalorder 1, %s16
      %p124 = scmp.lt.s32.totalorder %s16, 3
      %p125 = pnand %p123, %p124
      %p126 = pneg %p125
      // Predicated region
      $region9: #{memory_module_forward.3} parent=5 // pred_check
        _
      $region10: #{memory_module_forward.3} parent=5 // pred_check_branch
        %128 = sbr.rel (%p125) target = $region12
      $region11: #{memory_module_forward.3} parent=5 // pred_region
        %s129 = ssub.s32 %s16, 1
        // Predicated region
        $region13: #{memory_module_forward.3} parent=11 // pred_check
          %p130 = pneg %p63
        $region14: #{memory_module_forward.3} parent=11 // pred_check_branch
          %132 = sbr.rel (%p130) target = $region16
        $region15: #{memory_module_forward.3} parent=11 // pred_region
          _
        $region16: #{memory_module_forward.3} parent=11 // pred_fallthru
          _
      $region12: #{memory_module_forward.3} parent=5 // pred_fallthru
        _
      %p133 = scmp.lt.s32.totalorder %s16, 2
      // Predicated region
      $region17: #{memory_module_forward.3} parent=5 // pred_check
        %p134 = pneg %p133
      $region18: #{memory_module_forward.3} parent=5 // pred_check_branch
        %136 = sbr.rel (%p134) target = $region20
      $region19: #{memory_module_forward.3} parent=5 // pred_region
        // Predicated region
        $region21: #{memory_module_forward.3} parent=19 // pred_check
          %p137 = pneg %p36
        $region22: #{memory_module_forward.3} parent=19 // pred_check_branch
          %139 = sbr.rel (%p137) target = $region24
        $region23: #{memory_module_forward.3} parent=19 // pred_region
          %p140 = scmp.lt.s32.totalorder %s16, 1
          %s141 = scalar_select %p140, %s16, 1
          %s142 = smul.addr %s141, 8
          %s143 = scalar_lea.vmem %s0, %s142
        $region24: #{memory_module_forward.3} parent=19 // pred_fallthru
          _
      $region20: #{memory_module_forward.3} parent=5 // pred_fallthru
        _
      %p144 = scmp.le.s32.totalorder 1, %s16
      %p145 = scmp.lt.s32.totalorder %s16, 3
      %p146 = pnand %p144, %p145
      %p147 = pneg %p146
      // Predicated region
      $region25: #{memory_module_forward.3} parent=5 // pred_check
        _
      $region26: #{memory_module_forward.3} parent=5 // pred_check_branch
        %149 = sbr.rel (%p146) target = $region28
      $region27: #{memory_module_forward.3} parent=5 // pred_region
        %s150 = ssub.s32 %s16, 1
        %p151 = scmp.lt.s32.totalorder %s21, 1
        %s152 = scalar_select %p151, %s21, 1
        %s153 = smul.addr %s152, 8
        %s154 = scalar_lea.vmem %s0, %s153
        %p155 = pneg %p42
        %p156 = pneg %p39
        %p157 = pneg %p63
        %p158 = pneg %p60
        %p159 = pneg %p89
        %p160 = pneg %p86
        %s161 = sand.u32 %s76, 1
        %s162 = scalar_lea.sflag [#allocation3], %s161
        %s163 = sand.u32 %s76, 1
        %s164 = smul.addr %s163, 8
        %s165 = scalar_lea.vmem [#allocation2], %s164
        %p166 = pneg %p115
        %p167 = pneg %p112
        %s168 = sand.u32 %s102, 1
        %s169 = scalar_lea.sflag [#allocation5], %s168
        %s170 = sand.u32 %s102, 1
        %s171 = smul.addr %s170, 8
        %s172 = scalar_lea.vmem [#allocation4], %s171
        %p173 = scmp.lt.s32.totalorder %s21, 1
        %s174 = scalar_select %p173, %s21, 1
        %s175 = smul.addr %s174, 8
        %s176 = scalar_lea.vmem %s0, %s175
        %v177 = vld [vmem:[%s1] sm:$0xff]
        %v178 = vld [vmem:[%s1 + $0x8] sm:$0x3]
        %v179 = vld [vmem:[%s176] sm:$0xff]
        %v180 = vmul.f32 %v179, %v179
        %vm181 = vcmask 261120
        %v182 = vsel %vm181, %v180, 0.0
        %183 = vadd.xlane.f32.xlu0 %v182
        %v184 = vpop.xlane.xlu0 %183
        %v185 = vrsqrt.pop %v184
        %v186 = vmul.f32 %v184, %v185
        %vm187 = vcmp.eq.f32.partialorder %v184, inf
        %v188 = vsel %vm187, %v184, %v186
        %vm189 = vcmp.eq.f32.partialorder %v184, 0.0
        %v190 = vand.u32 %v184, 2147483648
        %v191 = vsel %vm189, %v190, %v188
        %v192 = vmax.f32 %v191, 1e-12
        %v193 = vrcp.pop %v192
        %v194 = vmul.f32 %v179, %v193
        %v196 = vsel %vm181, %v194, 0
        %v199 = vsel %vm181, %v177, 0
        %v202 = vsel %vm181, %v178, 0
        %204 = vmatprep.subr.mxu0 0.0
        %205 = vmatpush1.xpose.msra.mxu0 0.0
        %206 = vmatprep.subr.mxu0 0.0
        %207 = vmatpush1.xpose.msra.mxu0 0.0
        %208 = vmatprep.subr.mxu0 0.0
        %209 = vmatpush1.xpose.msra.mxu0 0.0
        %210 = vmatprep.subr.mxu0 0.0
        %211 = vmatpush1.xpose.msra.mxu0 0.0
        %212 = vmatprep.subr.mxu0 0.0
        %213 = vmatpush1.xpose.msra.mxu0 0.0
        %214 = vmatprep.subr.mxu0 0.0
        %215 = vmatpush1.xpose.msra.mxu0 0.0
        %216 = vmatprep.subr.mxu0 0.0
        %217 = vmatpush1.xpose.msra.mxu0 0.0
        %218 = vmatprep.subr.mxu0 0.0
        %219 = vmatpush1.xpose.msra.mxu0 0.0
        %220 = vmatprep.subr.mxu0 0.0
        %221 = vmatpush1.xpose.msra.mxu0 0.0
        %222 = vmatprep.subr.mxu0 0.0
        %223 = vmatpush1.xpose.msra.mxu0 0.0
        %224 = vmatprep.subr.mxu0 0.0
        %225 = vmatpush1.xpose.msra.mxu0 0.0
        %226 = vmatprep.subr.mxu0 0.0
        %227 = vmatpush1.xpose.msra.mxu0 0.0
        %228 = vmatprep.subr.mxu0 0.0
        %229 = vmatpush1.xpose.msra.mxu0 0.0
        %230 = vmatprep.subr.mxu0 0.0
        %231 = vmatpush1.xpose.msra.mxu0 0.0
        %232 = vmatprep.subr.mxu0 0.0
        %233 = vmatpush1.xpose.msra.mxu0 %v202
        %234 = vmatprep.subr.mxu0 0.0
        %235 = vmatpush1.xpose.msra.mxu0 %v199
        %236 = vmatprep.subr.mxu0 0.0
        %237 = vmatpush2.xpose.msra.mxu0 0.0
        %238 = vmatprep.subr.mxu0 0.0
        %239 = vmatpush2.xpose.msra.mxu0 0.0
        %240 = vmatprep.subr.mxu0 0.0
        %241 = vmatpush2.xpose.msra.mxu0 0.0
        %242 = vmatprep.subr.mxu0 0.0
        %243 = vmatpush2.xpose.msra.mxu0 0.0
        %244 = vmatprep.subr.mxu0 0.0
        %245 = vmatpush2.xpose.msra.mxu0 0.0
        %246 = vmatprep.subr.mxu0 0.0
        %247 = vmatpush2.xpose.msra.mxu0 0.0
        %248 = vmatprep.subr.mxu0 0.0
        %249 = vmatpush2.xpose.msra.mxu0 0.0
        %250 = vmatprep.subr.mxu0 0.0
        %251 = vmatpush2.xpose.msra.mxu0 0.0
        %252 = vmatprep.subr.mxu0 0.0
        %253 = vmatpush2.xpose.msra.mxu0 0.0
        %254 = vmatprep.subr.mxu0 0.0
        %255 = vmatpush2.xpose.msra.mxu0 0.0
        %256 = vmatprep.subr.mxu0 0.0
        %257 = vmatpush2.xpose.msra.mxu0 0.0
        %258 = vmatprep.subr.mxu0 0.0
        %259 = vmatpush2.xpose.msra.mxu0 0.0
        %260 = vmatprep.subr.mxu0 0.0
        %261 = vmatpush2.xpose.msra.mxu0 0.0
        %262 = vmatprep.subr.mxu0 0.0
        %263 = vmatpush2.xpose.msra.mxu0 0.0
        %264 = vmatprep.subr.mxu0 0.0
        %265 = vmatpush2.xpose.msra.mxu0 0.0
        %266 = vmatprep.subr.mxu0 0.0
        %267 = vmatpush2.xpose.msra.mxu0 0.0
        %268 = vmatprep.mubr.f32.mxu0 0.0
        %269 = vmatmul.mubr.f32.gmra.mxu0 %v196
        %v270 = vpop.f32.mrf.mxu0
        %v271 = vadd.f32 0.0, %v270
        %v272 = vpop.f32.mrf.mxu0
        %273 = vdwg.mxu0
        %vm274 = vcmask 80896
        %v275 = vsel %vm274, %v271, -inf
        %276 = vmax.xlane.f32.xlu0 %v275
        %v277 = vpop.xlane.xlu0 %276
        %v278 = vsub.f32 %v271, %v277
        %v279 = vmul.f32 %v278, 1.442695
        %v280 = vpow.pop %v279
        %v281 = vsel %vm274, %v280, 0.0
        %282 = vadd.xlane.f32.xlu0 %v281
        %v283 = vpop.xlane.xlu0 %282
        %v284 = vrcp.pop %v283
        %v285 = vmul.f32 %v280, %v284
        %v286 = vsub.f32 %v285, 0.0025
        %v287 = vmax.f32 %v286, 0.0
        %v288 = vmul.f32 %v287, %v285
        %v289 = vand.u32 2147483647, %v286
        %v290 = vadd.f32 %v289, 1e-12
        %v291 = vrcp.pop %v290
        %v292 = vmul.f32 %v288, %v291
        %v293 = vand.u32 2147483647, %v292
        %v294 = vsel %vm274, %v293, 0.0
        %295 = vadd.xlane.f32.xlu0 %v294
        %v296 = vpop.xlane.xlu0 %295
        %v297 = vmax.f32 %v296, 1e-12
        %v298 = vrcp.pop %v297
        %v299 = vmul.f32 %v292, %v298
        %v301 = vsel %vm274, %v299, 0
        %vm303 = vcmask 1041408
        %v304 = vsel %vm303, %v178, 0
        %306 = vmatprep.subr.mxu0 0.0
        %307 = vmatpush1.msra.mxu0 0.0
        %308 = vmatprep.subr.mxu0 0.0
        %309 = vmatpush1.msra.mxu0 0.0
        %310 = vmatprep.subr.mxu0 0.0
        %311 = vmatpush1.msra.mxu0 0.0
        %312 = vmatprep.subr.mxu0 0.0
        %313 = vmatpush1.msra.mxu0 0.0
        %314 = vmatprep.subr.mxu0 0.0
        %315 = vmatpush1.msra.mxu0 0.0
        %316 = vmatprep.subr.mxu0 0.0
        %317 = vmatpush1.msra.mxu0 0.0
        %318 = vmatprep.subr.mxu0 0.0
        %319 = vmatpush1.msra.mxu0 0.0
        %320 = vmatprep.subr.mxu0 0.0
        %321 = vmatpush1.msra.mxu0 0.0
        %322 = vmatprep.subr.mxu0 0.0
        %323 = vmatpush1.msra.mxu0 0.0
        %324 = vmatprep.subr.mxu0 0.0
        %325 = vmatpush1.msra.mxu0 0.0
        %326 = vmatprep.subr.mxu0 0.0
        %327 = vmatpush1.msra.mxu0 0.0
        %328 = vmatprep.subr.mxu0 0.0
        %329 = vmatpush1.msra.mxu0 0.0
        %330 = vmatprep.subr.mxu0 0.0
        %331 = vmatpush1.msra.mxu0 0.0
        %332 = vmatprep.subr.mxu0 0.0
        %333 = vmatpush1.msra.mxu0 0.0
        %334 = vmatprep.subr.mxu0 0.0
        %335 = vmatpush1.msra.mxu0 %v304
        %336 = vmatprep.subr.mxu0 0.0
        %337 = vmatpush1.msra.mxu0 %v177
        %338 = vmatprep.subr.mxu0 0.0
        %339 = vmatpush2.msra.mxu0 0.0
        %340 = vmatprep.subr.mxu0 0.0
        %341 = vmatpush2.msra.mxu0 0.0
        %342 = vmatprep.subr.mxu0 0.0
        %343 = vmatpush2.msra.mxu0 0.0
        %344 = vmatprep.subr.mxu0 0.0
        %345 = vmatpush2.msra.mxu0 0.0
        %346 = vmatprep.subr.mxu0 0.0
        %347 = vmatpush2.msra.mxu0 0.0
        %348 = vmatprep.subr.mxu0 0.0
        %349 = vmatpush2.msra.mxu0 0.0
        %350 = vmatprep.subr.mxu0 0.0
        %351 = vmatpush2.msra.mxu0 0.0
        %352 = vmatprep.subr.mxu0 0.0
        %353 = vmatpush2.msra.mxu0 0.0
        %354 = vmatprep.subr.mxu0 0.0
        %355 = vmatpush2.msra.mxu0 0.0
        %356 = vmatprep.subr.mxu0 0.0
        %357 = vmatpush2.msra.mxu0 0.0
        %358 = vmatprep.subr.mxu0 0.0
        %359 = vmatpush2.msra.mxu0 0.0
        %360 = vmatprep.subr.mxu0 0.0
        %361 = vmatpush2.msra.mxu0 0.0
        %362 = vmatprep.subr.mxu0 0.0
        %363 = vmatpush2.msra.mxu0 0.0
        %364 = vmatprep.subr.mxu0 0.0
        %365 = vmatpush2.msra.mxu0 0.0
        %366 = vmatprep.subr.mxu0 0.0
        %367 = vmatpush2.msra.mxu0 0.0
        %368 = vmatprep.subr.mxu0 0.0
        %369 = vmatpush2.msra.mxu0 0.0
        %370 = vmatprep.mubr.f32.mxu0 0.0
        %371 = vmatmul.mubr.f32.gmra.mxu0 %v301
        %v372 = vpop.f32.mrf.mxu0
        %v373 = vadd.f32 0.0, %v372
        %v374 = vpop.f32.mrf.mxu0
        %375 = vdwg.mxu0
        %376 = vst.msk [vmem:[%s165] sm:$0xff] %vm181, %v194
        %378 = vrot.lane.b32.xlu0 %v373, 32
        %v379 = vpop.permute.xlu0 %378
        %vm381 = vcmask 523520
        %382 = vst.msk [vmem:[%s165] sm:$0xff] %vm381, %v379
        %383 = vst.msk [vmem:[%s172] sm:$0xff] %vm274, %v299
        %s384 = sand.u32 %s76, 1
        %s385 = scalar_lea.sflag [#allocation3], %s384
        %s386 = sand.u32 %s76, 1
        %s387 = smul.addr %s386, 8
        %s388 = scalar_lea.vmem [#allocation2], %s387
        %s389 = sand.u32 %s102, 1
        %s390 = scalar_lea.sflag [#allocation5], %s389
        %s391 = sand.u32 %s102, 1
        %s392 = smul.addr %s391, 8
        %s393 = scalar_lea.vmem [#allocation4], %s392
        // Predicated region
        $region29: #{memory_module_forward.3} parent=27 // pred_check
          %p394 = pneg %p86
        $region30: #{memory_module_forward.3} parent=27 // pred_check_branch
          %396 = sbr.rel (%p394) target = $region32
        $region31: #{memory_module_forward.3} parent=27 // pred_region
          %s398 = ssub.s32 128, 128
          %399 = vsyncadd %s385, %s398
          %s400 = smul.addr %s21, 128
          %s401 = scalar_lea.hbm %s2, %s400
          %s403 = sshll.u32 %s388, 4
          %s404 = int_to_ptr.vmem [resolvable:$true] %s403
          %406 = dma.vmem_to_hbm [thread:$0]  %s404, 128, %s401, %s385
        $region32: #{memory_module_forward.3} parent=27 // pred_fallthru
          _
        // Predicated region
        $region33: #{memory_module_forward.3} parent=27 // pred_check
          %p407 = pneg %p112
        $region34: #{memory_module_forward.3} parent=27 // pred_check_branch
          %409 = sbr.rel (%p407) target = $region36
        $region35: #{memory_module_forward.3} parent=27 // pred_region
          %s411 = ssub.s32 128, 128
          %412 = vsyncadd %s390, %s411
          %s413 = smul.addr %s21, 128
          %s414 = scalar_lea.hbm %s3, %s413
          %s416 = sshll.u32 %s393, 4
          %s417 = int_to_ptr.vmem [resolvable:$true] %s416
          %419 = dma.vmem_to_hbm [thread:$0]  %s417, 128, %s414, %s390
        $region36: #{memory_module_forward.3} parent=27 // pred_fallthru
          _
      $region28: #{memory_module_forward.3} parent=5 // pred_fallthru
        _
      %p420 = scmp.le.s32.totalorder 2, %s16
      // Predicated region
      $region37: #{memory_module_forward.3} parent=5 // pred_check
        %p421 = pneg %p420
      $region38: #{memory_module_forward.3} parent=5 // pred_check_branch
        %423 = sbr.rel (%p421) target = $region40
      $region39: #{memory_module_forward.3} parent=5 // pred_region
        %s424 = ssub.s32 %s16, 2
        // Predicated region
        $region41: #{memory_module_forward.3} parent=39 // pred_check
          %p425 = pneg %p92
        $region42: #{memory_module_forward.3} parent=39 // pred_check_branch
          %427 = sbr.rel (%p425) target = $region44
        $region43: #{memory_module_forward.3} parent=39 // pred_region
          %s428 = sand.u32 %s77, 1
          %s429 = scalar_lea.sflag [#allocation3], %s428
          %s430 = sand.u32 %s77, 1
          %s431 = smul.addr %s430, 8
          %s432 = scalar_lea.vmem [#allocation2], %s431
          %433 = dma.done %s429, 128
        $region44: #{memory_module_forward.3} parent=39 // pred_fallthru
          _
        // Predicated region
        $region45: #{memory_module_forward.3} parent=39 // pred_check
          %p434 = pneg %p118
        $region46: #{memory_module_forward.3} parent=39 // pred_check_branch
          %436 = sbr.rel (%p434) target = $region48
        $region47: #{memory_module_forward.3} parent=39 // pred_region
          %s437 = sand.u32 %s103, 1
          %s438 = scalar_lea.sflag [#allocation5], %s437
          %s439 = sand.u32 %s103, 1
          %s440 = smul.addr %s439, 8
          %s441 = scalar_lea.vmem [#allocation4], %s440
          %442 = dma.done %s438, 128
        $region48: #{memory_module_forward.3} parent=39 // pred_fallthru
          _
      $region40: #{memory_module_forward.3} parent=5 // pred_fallthru
        _
    $region6: #{memory_module_forward.3} parent=1 // loop_footer
      %s20 = sadd.s32 1, %s16
    $region7: #{memory_module_forward.3} parent=1 // loop_footer_branch
      %15 = sbr.rel target = $region3
    $region8: #{memory_module_forward.3} parent=1 // loop_exit
      _
    %443 = vsyncpa [#allocation3], 1
    %s444 = scalar_lea.sflag [#allocation3], 1
    %445 = vsyncpa %s444, 1
    %446 = vsyncpa [#allocation5], 1
    %s447 = scalar_lea.sflag [#allocation5], 1
    %448 = vsyncpa %s447, 1

// kernel: memory_module_forward.2
$region0: #{memory_module_forward.2}
  #allocation0 [shape = 'u32[]', space=smem, size = 0x4, offset = 0x4, fixed_abs, tag = 'smem constant byte address 0x4 - core index']
  #allocation1 [shape = 'u32[144,128]{1,0:T(1,128)}', space=vmem, size = 0x12000, scoped, tag = 'internal scratch']
  #allocation2 [shape = 'f32[10,1]{1,0:T(8,128)}', space=vmem, size = 0x2000, scoped, tag = 'scratch operand']
  #allocation3 [shape = 'f32[10,1]{1,0:T(8,128)}', space=vmem, size = 0x2000, scoped, tag = 'scratch operand']
  #allocation4 [shape = 'f32[10,1]{1,0:T(8,128)}', space=vmem, size = 0x2000, scoped, tag = 'scratch operand']
  #allocation5 [shape = 'f32[10,32]{1,0:T(8,128)}', space=vmem, size = 0x2000, scoped, tag = 'scratch operand']
  %s0 = inlined_call_operand.hbm [shape: f32[10,32], index: 0, kind: input, shape index: {}]
  %s1 = inlined_call_operand.hbm [shape: f32[16,32], index: 1, kind: input, shape index: {}]
  %s2 = inlined_call_operand.hbm [shape: f32[32,32], index: 2, kind: input, shape index: {}]
  %s3 = inlined_call_operand.vmem [shape: f32[1,32], index: 3, kind: input, shape index: {}]
  %s4 = inlined_call_operand.hbm [shape: f32[32,32], index: 4, kind: input, shape index: {}]
  %s5 = inlined_call_operand.vmem [shape: f32[1,32], index: 5, kind: input, shape index: {}]
  %s6 = inlined_call_operand.vmem [shape: f32[10,32], index: 6, kind: output, shape index: {}]
  %s7 = sld [smem:[#allocation0]]
  $region93: #{memory_module_forward.2} parent=0
    _
  %s9 = ssub.s32 1, %s7
  %s10 = scalar_select 0, %s9, %s7
  $region1: #{memory_module_forward.2} parent=0
    #allocation6 [shape = 'u8[8192]{0}', space=vmem, size = 0x2000, scoped, tag = 'input window, operand 0, single buffered']
    #allocation7 [shape = 's32[2]{0}', space=sflag, size = 0x8, scoped, tag = 'scoped memory for memory_module_forward.2']
    #allocation8 [shape = 'u8[8192]{0}', space=vmem, size = 0x2000, scoped, tag = 'input window, operand 1, single buffered']
    #allocation9 [shape = 's32[1]{0}', space=sflag, size = 0x4, scoped, tag = 'scoped memory for memory_module_forward.2']
    #allocation10 [shape = 'u8[16384]{0}', space=vmem, size = 0x4000, scoped, tag = 'input window, operand 2, single buffered']
    #allocation11 [shape = 'u8[16384]{0}', space=vmem, size = 0x4000, scoped, tag = 'input window, operand 4, single buffered']
    #allocation12 [shape = 's32[1]{0}', space=sflag, size = 0x4, scoped, tag = 'scoped memory for memory_module_forward.2']
    %11 = vsyncpa [#allocation7], 0
    %12 = vsyncpa [#allocation9], 0
    %13 = vsyncpa [#allocation12], 0
    loop: start=0, step=1, limit=4
    $region2: #{memory_module_forward.2} parent=1 // loop_pre_header
      _
    $region3: #{memory_module_forward.2} parent=1 // loop_header
      %s15 = sphi 0, %s19
      %p16 = scmp.ge.s32.totalorder %s15, 4
      %s22 = sphi 0, %s34
      %s23 = sphi 0, %s30
      %s24 = sphi 0, %s22
      %s25 = sphi 0, %s23
      %s26 = sphi 0, %s24
      %s27 = sphi 0, %s25
      %s35 = sphi 0, %s35
      %s37 = sphi 0, %s35
      %s38 = sphi 0, %s37
      %s52 = sphi 0, %s38
      %s58 = sphi 0, %s60
      %s61 = sphi 0, %s58
      %s62 = sphi 0, %s61
      %s78 = sphi 0, %s62
      %s82 = sphi 0, %s82
      %s84 = sphi 0, %s82
      %s85 = sphi 0, %s84
      %s99 = sphi 0, %s85
      %s103 = sphi 0, %s103
      %s105 = sphi 0, %s103
      %s106 = sphi 0, %s105
      %s120 = sphi 0, %s106
      %s124 = sphi 0, %s124
      %s126 = sphi 0, %s124
      %s127 = sphi 0, %s126
      %s141 = sphi 0, %s127
      %s145 = sphi 0, %s145
      %s147 = sphi 0, %s145
      %s148 = sphi 0, %s147
      %s162 = sphi 0, %s148
      %s166 = sphi 0, %s166
      %s168 = sphi 0, %s166
      %s169 = sphi 0, %s168
      %s183 = sphi 0, %s169
    $region4: #{memory_module_forward.2} parent=1 // loop_header_branch
      %18 = sbr.rel (%p16) target = $region8
    $region5: #{memory_module_forward.2} parent=1 // loop_body
      %s20 = ssub.s32 %s15, 1
      %s21 = ssub.s32 %s15, 2
      %s28 = sadd.s32 1, %s23
      %p29 = scmp.ge.s32.totalorder %s28, 1
      %s30 = scalar_select %p29, 0, %s28
      %s31 = sadd.s32 1, %s22
      %s32 = scalar_select %p29, %s31, %s22
      %p33 = scmp.ge.s32.totalorder %s32, 2
      %s34 = scalar_select %p33, 0, %s32
      %s36 = sadd.s32 %s35, 1
      %p39 = scmp.eq.s32.totalorder %s15, 1
      %p40 = scmp.ne.s32.totalorder %s35, %s37
      %p41 = scmp.eq.s32.totalorder %s15, 0
      %p42 = por %p40, %p41
      %p43 = scmp.ne.s32.totalorder %s35, %s37
      %p44 = scmp.eq.s32.totalorder %s20, 1
      %p45 = por %p43, %p44
      %p46 = scmp.ne.s32.totalorder %s37, %s38
      %p47 = scmp.eq.s32.totalorder %s20, 0
      %p48 = por %p46, %p47
      %p49 = scmp.ne.s32.totalorder %s37, %s38
      %p50 = scmp.eq.s32.totalorder %s21, 1
      %p51 = por %p49, %p50
      %p53 = scmp.ne.s32.totalorder %s38, %s52
      %p54 = scmp.eq.s32.totalorder %s21, 0
      %p55 = por %p53, %p54
      %s56 = ssub.s32 %s23, %s30
      %p57 = scmp.eq.s32.totalorder %s56, 0
      %s59 = sadd.s32 %s58, 1
      %s60 = scalar_select %p57, %s58, %s59
      %p63 = pneg %p57
      %p64 = scmp.eq.s32.totalorder %s15, 1
      %p65 = por %p63, %p64
      %p66 = scmp.ne.s32.totalorder %s58, %s61
      %p67 = scmp.eq.s32.totalorder %s15, 0
      %p68 = por %p66, %p67
      %p69 = scmp.ne.s32.totalorder %s58, %s61
      %p70 = scmp.eq.s32.totalorder %s20, 1
      %p71 = por %p69, %p70
      %p72 = scmp.ne.s32.totalorder %s61, %s62
      %p73 = scmp.eq.s32.totalorder %s20, 0
      %p74 = por %p72, %p73
      %p75 = scmp.ne.s32.totalorder %s61, %s62
      %p76 = scmp.eq.s32.totalorder %s21, 1
      %p77 = por %p75, %p76
      %p79 = scmp.ne.s32.totalorder %s62, %s78
      %p80 = scmp.eq.s32.totalorder %s21, 0
      %p81 = por %p79, %p80
      %s83 = sadd.s32 %s82, 1
      %p86 = scmp.eq.s32.totalorder %s15, 1
      %p87 = scmp.ne.s32.totalorder %s82, %s84
      %p88 = scmp.eq.s32.totalorder %s15, 0
      %p89 = por %p87, %p88
      %p90 = scmp.ne.s32.totalorder %s82, %s84
      %p91 = scmp.eq.s32.totalorder %s20, 1
      %p92 = por %p90, %p91
      %p93 = scmp.ne.s32.totalorder %s84, %s85
      %p94 = scmp.eq.s32.totalorder %s20, 0
      %p95 = por %p93, %p94
      %p96 = scmp.ne.s32.totalorder %s84, %s85
      %p97 = scmp.eq.s32.totalorder %s21, 1
      %p98 = por %p96, %p97
      %p100 = scmp.ne.s32.totalorder %s85, %s99
      %p101 = scmp.eq.s32.totalorder %s21, 0
      %p102 = por %p100, %p101
      %s104 = sadd.s32 %s103, 1
      %p107 = scmp.eq.s32.totalorder %s15, 1
      %p108 = scmp.ne.s32.totalorder %s103, %s105
      %p109 = scmp.eq.s32.totalorder %s15, 0
      %p110 = por %p108, %p109
      %p111 = scmp.ne.s32.totalorder %s103, %s105
      %p112 = scmp.eq.s32.totalorder %s20, 1
      %p113 = por %p111, %p112
      %p114 = scmp.ne.s32.totalorder %s105, %s106
      %p115 = scmp.eq.s32.totalorder %s20, 0
      %p116 = por %p114, %p115
      %p117 = scmp.ne.s32.totalorder %s105, %s106
      %p118 = scmp.eq.s32.totalorder %s21, 1
      %p119 = por %p117, %p118
      %p121 = scmp.ne.s32.totalorder %s106, %s120
      %p122 = scmp.eq.s32.totalorder %s21, 0
      %p123 = por %p121, %p122
      %s125 = sadd.s32 %s124, 1
      %p128 = scmp.eq.s32.totalorder %s15, 1
      %p129 = scmp.ne.s32.totalorder %s124, %s126
      %p130 = scmp.eq.s32.totalorder %s15, 0
      %p131 = por %p129, %p130
      %p132 = scmp.ne.s32.totalorder %s124, %s126
      %p133 = scmp.eq.s32.totalorder %s20, 1
      %p134 = por %p132, %p133
      %p135 = scmp.ne.s32.totalorder %s126, %s127
      %p136 = scmp.eq.s32.totalorder %s20, 0
      %p137 = por %p135, %p136
      %p138 = scmp.ne.s32.totalorder %s126, %s127
      %p139 = scmp.eq.s32.totalorder %s21, 1
      %p140 = por %p138, %p139
      %p142 = scmp.ne.s32.totalorder %s127, %s141
      %p143 = scmp.eq.s32.totalorder %s21, 0
      %p144 = por %p142, %p143
      %s146 = sadd.s32 %s145, 1
      %p149 = scmp.eq.s32.totalorder %s15, 1
      %p150 = scmp.ne.s32.totalorder %s145, %s147
      %p151 = scmp.eq.s32.totalorder %s15, 0
      %p152 = por %p150, %p151
      %p153 = scmp.ne.s32.totalorder %s145, %s147
      %p154 = scmp.eq.s32.totalorder %s20, 1
      %p155 = por %p153, %p154
      %p156 = scmp.ne.s32.totalorder %s147, %s148
      %p157 = scmp.eq.s32.totalorder %s20, 0
      %p158 = por %p156, %p157
      %p159 = scmp.ne.s32.totalorder %s147, %s148
      %p160 = scmp.eq.s32.totalorder %s21, 1
      %p161 = por %p159, %p160
      %p163 = scmp.ne.s32.totalorder %s148, %s162
      %p164 = scmp.eq.s32.totalorder %s21, 0
      %p165 = por %p163, %p164
      %s167 = sadd.s32 %s166, 1
      %p170 = scmp.eq.s32.totalorder %s15, 1
      %p171 = scmp.ne.s32.totalorder %s166, %s168
      %p172 = scmp.eq.s32.totalorder %s15, 0
      %p173 = por %p171, %p172
      %p174 = scmp.ne.s32.totalorder %s166, %s168
      %p175 = scmp.eq.s32.totalorder %s20, 1
      %p176 = por %p174, %p175
      %p177 = scmp.ne.s32.totalorder %s168, %s169
      %p178 = scmp.eq.s32.totalorder %s20, 0
      %p179 = por %p177, %p178
      %p180 = scmp.ne.s32.totalorder %s168, %s169
      %p181 = scmp.eq.s32.totalorder %s21, 1
      %p182 = por %p180, %p181
      %p184 = scmp.ne.s32.totalorder %s169, %s183
      %p185 = scmp.eq.s32.totalorder %s21, 0
      %p186 = por %p184, %p185
      %p187 = scmp.le.s32.totalorder 1, %s15
      %p188 = scmp.lt.s32.totalorder %s15, 3
      %p189 = pnand %p187, %p188
      %p190 = pneg %p189
      // Predicated region
      $region9: #{memory_module_forward.2} parent=5 // pred_check
        _
      $region10: #{memory_module_forward.2} parent=5 // pred_check_branch
        %192 = sbr.rel (%p189) target = $region12
      $region11: #{memory_module_forward.2} parent=5 // pred_region
        %s193 = ssub.s32 %s15, 1
        // Predicated region
        $region13: #{memory_module_forward.2} parent=11 // pred_check
          %p194 = pneg %p48
        $region14: #{memory_module_forward.2} parent=11 // pred_check_branch
          %196 = sbr.rel (%p194) target = $region16
        $region15: #{memory_module_forward.2} parent=11 // pred_region
          %s198 = ssub.s32 256, 256
          %199 = vsyncadd [#allocation7], %s198
          %s200 = sshll.u32 [#allocation6], 4
          %s201 = int_to_ptr.vmem [resolvable:$true] %s200
          %206 = dma.hbm_to_vmem [thread:$0]  %s0, 256, %s201, [#allocation7], 128, 128, 8
        $region16: #{memory_module_forward.2} parent=11 // pred_fallthru
          _
        // Predicated region
        $region17: #{memory_module_forward.2} parent=11 // pred_check
          %p207 = pneg %p74
        $region18: #{memory_module_forward.2} parent=11 // pred_check_branch
          %209 = sbr.rel (%p207) target = $region20
        $region19: #{memory_module_forward.2} parent=11 // pred_region
          %s210 = smul.u32 2, %s25
          %s212 = ssub.s32 256, 256
          %213 = vsyncadd [#allocation9], %s212
          %s214 = smul.addr %s210, 128
          %s215 = scalar_lea.hbm %s1, %s214
          %s216 = sshll.u32 [#allocation8], 4
          %s217 = int_to_ptr.vmem [resolvable:$true] %s216
          %222 = dma.hbm_to_vmem [thread:$0]  %s215, 256, %s217, [#allocation9], 128, 128, 8
        $region20: #{memory_module_forward.2} parent=11 // pred_fallthru
          _
        // Predicated region
        $region21: #{memory_module_forward.2} parent=11 // pred_check
          %p223 = pneg %p95
        $region22: #{memory_module_forward.2} parent=11 // pred_check_branch
          %225 = sbr.rel (%p223) target = $region24
        $region23: #{memory_module_forward.2} parent=11 // pred_region
          %s227 = ssub.s32 512, 512
          %228 = vsyncadd [#allocation9], %s227
          %s229 = sshll.u32 [#allocation10], 4
          %s230 = int_to_ptr.vmem [resolvable:$true] %s229
          %235 = dma.hbm_to_vmem [thread:$0]  %s2, 512, %s230, [#allocation9], 128, 128, 8
        $region24: #{memory_module_forward.2} parent=11 // pred_fallthru
          _
        // Predicated region
        $region25: #{memory_module_forward.2} parent=11 // pred_check
          %p236 = pneg %p116
        $region26: #{memory_module_forward.2} parent=11 // pred_check_branch
          %238 = sbr.rel (%p236) target = $region28
        $region27: #{memory_module_forward.2} parent=11 // pred_region
          _
        $region28: #{memory_module_forward.2} parent=11 // pred_fallthru
          _
        // Predicated region
        $region29: #{memory_module_forward.2} parent=11 // pred_check
          %p239 = pneg %p137
        $region30: #{memory_module_forward.2} parent=11 // pred_check_branch
          %241 = sbr.rel (%p239) target = $region32
        $region31: #{memory_module_forward.2} parent=11 // pred_region
          %s243 = ssub.s32 512, 512
          %244 = vsyncadd [#allocation12], %s243
          %s245 = sshll.u32 [#allocation11], 4
          %s246 = int_to_ptr.vmem [resolvable:$true] %s245
          %251 = dma.hbm_to_vmem [thread:$0]  %s4, 512, %s246, [#allocation12], 128, 128, 8
        $region32: #{memory_module_forward.2} parent=11 // pred_fallthru
          _
        // Predicated region
        $region33: #{memory_module_forward.2} parent=11 // pred_check
          %p252 = pneg %p158
        $region34: #{memory_module_forward.2} parent=11 // pred_check_branch
          %254 = sbr.rel (%p252) target = $region36
        $region35: #{memory_module_forward.2} parent=11 // pred_region
          _
        $region36: #{memory_module_forward.2} parent=11 // pred_fallthru
          _
      $region12: #{memory_module_forward.2} parent=5 // pred_fallthru
        _
      %p255 = scmp.lt.s32.totalorder %s15, 2
      // Predicated region
      $region37: #{memory_module_forward.2} parent=5 // pred_check
        %p256 = pneg %p255
      $region38: #{memory_module_forward.2} parent=5 // pred_check_branch
        %258 = sbr.rel (%p256) target = $region40
      $region39: #{memory_module_forward.2} parent=5 // pred_region
        _
      $region40: #{memory_module_forward.2} parent=5 // pred_fallthru
        _
      %p259 = scmp.le.s32.totalorder 1, %s15
      %p260 = scmp.lt.s32.totalorder %s15, 3
      %p261 = pnand %p259, %p260
      %p262 = pneg %p261
      // Predicated region
      $region41: #{memory_module_forward.2} parent=5 // pred_check
        _
      $region42: #{memory_module_forward.2} parent=5 // pred_check_branch
        %264 = sbr.rel (%p261) target = $region44
      $region43: #{memory_module_forward.2} parent=5 // pred_region
        %s265 = ssub.s32 %s15, 1
        // Predicated region
        $region45: #{memory_module_forward.2} parent=43 // pred_check
          %p266 = pneg %p48
        $region46: #{memory_module_forward.2} parent=43 // pred_check_branch
          %268 = sbr.rel (%p266) target = $region48
        $region47: #{memory_module_forward.2} parent=43 // pred_region
          %269 = dma.done [#allocation7], 256
        $region48: #{memory_module_forward.2} parent=43 // pred_fallthru
          _
        // Predicated region
        $region49: #{memory_module_forward.2} parent=43 // pred_check
          %p270 = pneg %p74
        $region50: #{memory_module_forward.2} parent=43 // pred_check_branch
          %272 = sbr.rel (%p270) target = $region52
        $region51: #{memory_module_forward.2} parent=43 // pred_region
          %273 = dma.done [#allocation9], 256
        $region52: #{memory_module_forward.2} parent=43 // pred_fallthru
          _
        // Predicated region
        $region53: #{memory_module_forward.2} parent=43 // pred_check
          %p274 = pneg %p95
        $region54: #{memory_module_forward.2} parent=43 // pred_check_branch
          %276 = sbr.rel (%p274) target = $region56
        $region55: #{memory_module_forward.2} parent=43 // pred_region
          %277 = dma.done [#allocation9], 512
        $region56: #{memory_module_forward.2} parent=43 // pred_fallthru
          _
        // Predicated region
        $region57: #{memory_module_forward.2} parent=43 // pred_check
          %p278 = pneg %p137
        $region58: #{memory_module_forward.2} parent=43 // pred_check_branch
          %280 = sbr.rel (%p278) target = $region60
        $region59: #{memory_module_forward.2} parent=43 // pred_region
          %281 = dma.done [#allocation12], 512
        $region60: #{memory_module_forward.2} parent=43 // pred_fallthru
          _
        %p282 = pneg %p48
        %p283 = pneg %p45
        %p284 = pneg %p74
        %p285 = pneg %p71
        %p286 = pneg %p95
        %p287 = pneg %p92
        %p288 = pneg %p116
        %p289 = pneg %p113
        %p290 = pneg %p137
        %p291 = pneg %p134
        %p292 = pneg %p158
        %p293 = pneg %p155
        %p294 = pneg %p179
        %p295 = pneg %p176
        %s296 = smul.u32 2, %s25
        %v297 = vld [vmem:[#allocation6] sm:$0xff]
        %v298 = vld [vmem:[#allocation6 + $0x8] sm:$0x3]
        %v299 = vld [vmem:[#allocation8] sm:$0xff]
        %v300 = vld [vmem:[#allocation8 + $0x8] sm:$0xff]
        %v301 = vmul.f32 %v299, %v299
        %v302 = vmul.f32 %v300, %v300
        %vm303 = vcmask 261120
        %v304 = vsel %vm303, %v301, 0.0
        %305 = vadd.xlane.f32.xlu0 %v304
        %v306 = vpop.xlane.xlu0 %305
        %v307 = vsel %vm303, %v302, 0.0
        %308 = vadd.xlane.f32.xlu0 %v307
        %v309 = vpop.xlane.xlu0 %308
        %v310 = vrsqrt.pop %v306
        %v311 = vmul.f32 %v306, %v310
        %vm312 = vcmp.eq.f32.partialorder %v306, inf
        %v313 = vsel %vm312, %v306, %v311
        %vm314 = vcmp.eq.f32.partialorder %v306, 0.0
        %v315 = vand.u32 %v306, 2147483648
        %v316 = vsel %vm314, %v315, %v313
        %v317 = vrsqrt.pop %v309
        %v318 = vmul.f32 %v309, %v317
        %vm319 = vcmp.eq.f32.partialorder %v309, inf
        %v320 = vsel %vm319, %v309, %v318
        %vm321 = vcmp.eq.f32.partialorder %v309, 0.0
        %v322 = vand.u32 %v309, 2147483648
        %v323 = vsel %vm321, %v322, %v320
        %v324 = vmax.f32 %v316, 1e-12
        %v325 = vmax.f32 %v323, 1e-12
        %v326 = vrcp.pop %v324
        %v327 = vmul.f32 %v299, %v326
        %v328 = vrcp.pop %v325
        %v329 = vmul.f32 %v300, %v328
        %v331 = vsel %vm303, %v297, 0
        %v334 = vsel %vm303, %v298, 0
        %v337 = vsel %vm303, %v327, 0
        %v340 = vsel %vm303, %v329, 0
        %342 = vmatprep.subr.mxu0 0.0
        %343 = vmatpush1.xpose.msra.mxu0 0.0
        %344 = vmatprep.subr.mxu0 0.0
        %345 = vmatpush1.xpose.msra.mxu0 0.0
        %346 = vmatprep.subr.mxu0 0.0
        %347 = vmatpush1.xpose.msra.mxu0 0.0
        %348 = vmatprep.subr.mxu0 0.0
        %349 = vmatpush1.xpose.msra.mxu0 0.0
        %350 = vmatprep.subr.mxu0 0.0
        %351 = vmatpush1.xpose.msra.mxu0 0.0
        %352 = vmatprep.subr.mxu0 0.0
        %353 = vmatpush1.xpose.msra.mxu0 0.0
        %354 = vmatprep.subr.mxu0 0.0
        %355 = vmatpush1.xpose.msra.mxu0 0.0
        %356 = vmatprep.subr.mxu0 0.0
        %357 = vmatpush1.xpose.msra.mxu0 0.0
        %358 = vmatprep.subr.mxu0 0.0
        %359 = vmatpush1.xpose.msra.mxu0 0.0
        %360 = vmatprep.subr.mxu0 0.0
        %361 = vmatpush1.xpose.msra.mxu0 0.0
        %362 = vmatprep.subr.mxu0 0.0
        %363 = vmatpush1.xpose.msra.mxu0 0.0
        %364 = vmatprep.subr.mxu0 0.0
        %365 = vmatpush1.xpose.msra.mxu0 0.0
        %366 = vmatprep.subr.mxu0 0.0
        %367 = vmatpush1.xpose.msra.mxu0 0.0
        %368 = vmatprep.subr.mxu0 0.0
        %369 = vmatpush1.xpose.msra.mxu0 0.0
        %370 = vmatprep.subr.mxu0 0.0
        %371 = vmatpush1.xpose.msra.mxu0 %v340
        %372 = vmatprep.subr.mxu0 0.0
        %373 = vmatpush1.xpose.msra.mxu0 %v337
        %374 = vmatprep.subr.mxu0 0.0
        %375 = vmatpush2.xpose.msra.mxu0 0.0
        %376 = vmatprep.subr.mxu0 0.0
        %377 = vmatpush2.xpose.msra.mxu0 0.0
        %378 = vmatprep.subr.mxu0 0.0
        %379 = vmatpush2.xpose.msra.mxu0 0.0
        %380 = vmatprep.subr.mxu0 0.0
        %381 = vmatpush2.xpose.msra.mxu0 0.0
        %382 = vmatprep.subr.mxu0 0.0
        %383 = vmatpush2.xpose.msra.mxu0 0.0
        %384 = vmatprep.subr.mxu0 0.0
        %385 = vmatpush2.xpose.msra.mxu0 0.0
        %386 = vmatprep.subr.mxu0 0.0
        %387 = vmatpush2.xpose.msra.mxu0 0.0
        %388 = vmatprep.subr.mxu0 0.0
        %389 = vmatpush2.xpose.msra.mxu0 0.0
        %390 = vmatprep.subr.mxu0 0.0
        %391 = vmatpush2.xpose.msra.mxu0 0.0
        %392 = vmatprep.subr.mxu0 0.0
        %393 = vmatpush2.xpose.msra.mxu0 0.0
        %394 = vmatprep.subr.mxu0 0.0
        %395 = vmatpush2.xpose.msra.mxu0 0.0
        %396 = vmatprep.subr.mxu0 0.0
        %397 = vmatpush2.xpose.msra.mxu0 0.0
        %398 = vmatprep.subr.mxu0 0.0
        %399 = vmatpush2.xpose.msra.mxu0 0.0
        %400 = vmatprep.subr.mxu0 0.0
        %401 = vmatpush2.xpose.msra.mxu0 0.0
        %402 = vmatprep.subr.mxu0 0.0
        %403 = vmatpush2.xpose.msra.mxu0 0.0
        %404 = vmatprep.subr.mxu0 0.0
        %405 = vmatpush2.xpose.msra.mxu0 0.0
        %406 = vmatprep.mubr.f32.mxu0 0.0
        %407 = vmatmul.mubr.f32.gmra.mxu0 %v331
        %v408 = vpop.f32.mrf.mxu0
        %v409 = vadd.f32 0.0, %v408
        %v410 = vpop.f32.mrf.mxu0
        %411 = vmatprep.mubr.f32.mxu0 0.0
        %412 = vmatmul.mubr.f32.gmra.mxu0 %v334
        %v413 = vpop.f32.mrf.mxu0
        %v414 = vadd.f32 0.0, %v413
        %v415 = vpop.f32.mrf.mxu0
        %416 = vdwg.mxu0
        %p417 = scmp.eq.s32.totalorder %s24, 0
        %p418 = scmp.eq.s32.totalorder %s25, 0
        %p419 = pnand %p417, %p418
        %p420 = pneg %p419
        // Predicated region
        $region61: #{memory_module_forward.2} parent=43 // pred_check
          _
        $region62: #{memory_module_forward.2} parent=43 // pred_check_branch
          %422 = sbr.rel (%p419) target = $region64
        $region63: #{memory_module_forward.2} parent=43 // pred_region
          %vm423 = vcmask 7168
          %424 = vst.msk [vmem:[#allocation2] sm:$0xff] %vm423, -1e+30
          %vm425 = vcmask 1024
          %426 = vst.msk [vmem:[#allocation2 + $0x8] sm:$0x3] %vm425, -1e+30
          %427 = vst.msk [vmem:[#allocation3] sm:$0xff] %vm423, 0.0
          %428 = vst.msk [vmem:[#allocation3 + $0x8] sm:$0x3] %vm425, 0.0
        $region64: #{memory_module_forward.2} parent=43 // pred_fallthru
          _
        // Predicated region
        $region65: #{memory_module_forward.2} parent=43 // pred_check
          %p429 = pneg %p417
        $region66: #{memory_module_forward.2} parent=43 // pred_check_branch
          %431 = sbr.rel (%p429) target = $region68
        $region67: #{memory_module_forward.2} parent=43 // pred_region
          %v432 = vld [vmem:[#allocation2] sm:$0xff]
          %v433 = vld [vmem:[#allocation2 + $0x8] sm:$0x3]
          %vm434 = vcmask 130048
          %v435 = vsel %vm434, %v409, -inf
          %436 = vmax.xlane.f32.xlu0 %v435
          %v437 = vpop.xlane.xlu0 %436
          %vm438 = vcmask 123904
          %v439 = vsel %vm438, %v414, -inf
          %440 = vmax.xlane.f32.xlu0 %v439
          %v441 = vpop.xlane.xlu0 %440
          %v442 = vmax.f32 %v432, %v437
          %v443 = vmax.f32 %v433, %v441
          %v444 = vld [vmem:[#allocation3] sm:$0xff]
          %v445 = vld [vmem:[#allocation3 + $0x8] sm:$0x3]
          %v446 = vsub.f32 %v432, %v442
          %v447 = vsub.f32 %v433, %v443
          %v448 = vmul.f32 %v446, 1.442695
          %v449 = vpow.pop %v448
          %v450 = vmul.f32 %v447, 1.442695
          %v451 = vpow.pop %v450
          %v452 = vmul.f32 %v444, %v449
          %v453 = vmul.f32 %v445, %v451
          %455 = vset.pattern.permute.xlu0 0
          %456 = vperm.xlu0 %455, %v442
          %v457 = vpop.permute.xlu0 %456
          %460 = vset.pattern.permute.xlu0 0
          %461 = vperm.xlu0 %460, %v443
          %v462 = vpop.permute.xlu0 %461
          %v464 = vsub.f32 %v409, %v457
          %v465 = vsub.f32 %v414, %v462
          %v466 = vmul.f32 %v464, 1.442695
          %v467 = vpow.pop %v466
          %v468 = vmul.f32 %v465, 1.442695
          %v469 = vpow.pop %v468
          %v470 = vsel %vm434, %v467, 0.0
          %471 = vadd.xlane.f32.xlu0 %v470
          %v472 = vpop.xlane.xlu0 %471
          %v473 = vsel %vm438, %v469, 0.0
          %474 = vadd.xlane.f32.xlu0 %v473
          %v475 = vpop.xlane.xlu0 %474
          %v476 = vadd.f32 %v452, %v472
          %v477 = vadd.f32 %v453, %v475
          %vm478 = vcmask 7168
          %479 = vst.msk [vmem:[#allocation3] sm:$0xff] %vm478, %v476
          %vm480 = vcmask 1024
          %481 = vst.msk [vmem:[#allocation3 + $0x8] sm:$0x3] %vm480, %v477
          %482 = vst.msk [vmem:[#allocation2] sm:$0xff] %vm478, %v442
          %483 = vst.msk [vmem:[#allocation2 + $0x8] sm:$0x3] %vm480, %v443
        $region68: #{memory_module_forward.2} parent=43 // pred_fallthru
          _
        %p484 = scmp.eq.s32.totalorder %s24, 1
        %p485 = pnand %p484, %p418
        %p486 = pneg %p485
        // Predicated region
        $region69: #{memory_module_forward.2} parent=43 // pred_check
          _
        $region70: #{memory_module_forward.2} parent=43 // pred_check_branch
          %488 = sbr.rel (%p485) target = $region72
        $region71: #{memory_module_forward.2} parent=43 // pred_region
          %vm489 = vcmask 7168
          %490 = vst.msk [vmem:[#allocation4] sm:$0xff] %vm489, 0.0
          %vm491 = vcmask 1024
          %492 = vst.msk [vmem:[#allocation4 + $0x8] sm:$0x3] %vm491, 0.0
          %493 = vst.msk [vmem:[#allocation5] sm:$0xff] %vm303, 0.0
          %vm494 = vcmask 254976
          %495 = vst.msk [vmem:[#allocation5 + $0x8] sm:$0x3] %vm494, 0.0
        $region72: #{memory_module_forward.2} parent=43 // pred_fallthru
          _
        // Predicated region
        $region73: #{memory_module_forward.2} parent=43 // pred_check
          %p496 = pneg %p484
        $region74: #{memory_module_forward.2} parent=43 // pred_check_branch
          %498 = sbr.rel (%p496) target = $region76
        $region75: #{memory_module_forward.2} parent=43 // pred_region
          %v499 = vld [vmem:[#allocation2] sm:$0xff]
          %v500 = vld [vmem:[#allocation2 + $0x8] sm:$0x3]
          %502 = vset.pattern.permute.xlu0 0
          %503 = vperm.xlu0 %502, %v499
          %v504 = vpop.permute.xlu0 %503
          %507 = vset.pattern.permute.xlu0 0
          %508 = vperm.xlu0 %507, %v500
          %v509 = vpop.permute.xlu0 %508
          %v511 = vsub.f32 %v409, %v504
          %v512 = vsub.f32 %v414, %v509
          %v513 = vmul.f32 %v511, 1.442695
          %v514 = vpow.pop %v513
          %v515 = vmul.f32 %v512, 1.442695
          %v516 = vpow.pop %v515
          %v517 = vld [vmem:[#allocation3] sm:$0xff]
          %v518 = vld [vmem:[#allocation3 + $0x8] sm:$0x3]
          %520 = vset.pattern.permute.xlu0 0
          %521 = vperm.xlu0 %520, %v517
          %v522 = vpop.permute.xlu0 %521
          %525 = vset.pattern.permute.xlu0 0
          %526 = vperm.xlu0 %525, %v518
          %v527 = vpop.permute.xlu0 %526
          %v529 = vrcp.pop %v522
          %v530 = vmul.f32 %v514, %v529
          %v531 = vrcp.pop %v527
          %v532 = vmul.f32 %v516, %v531
          %v533 = vsub.f32 %v530, 0.0025
          %v534 = vsub.f32 %v532, 0.0025
          %v535 = vmax.f32 %v533, 0.0
          %v536 = vmax.f32 %v534, 0.0
          %v537 = vmul.f32 %v535, %v530
          %v538 = vmul.f32 %v536, %v532
          %v539 = vand.u32 2147483647, %v533
          %v540 = vand.u32 2147483647, %v534
          %v541 = vadd.f32 %v539, 1e-12
          %v542 = vadd.f32 %v540, 1e-12
          %v543 = vrcp.pop %v541
          %v544 = vmul.f32 %v537, %v543
          %v545 = vrcp.pop %v542
          %v546 = vmul.f32 %v538, %v545
          %v547 = vld [vmem:[#allocation4] sm:$0xff]
          %v548 = vld [vmem:[#allocation4 + $0x8] sm:$0x3]
          %v549 = vand.u32 2147483647, %v544
          %v550 = vand.u32 2147483647, %v546
          %vm551 = vcmask 130048
          %v552 = vsel %vm551, %v549, 0.0
          %553 = vadd.xlane.f32.xlu0 %v552
          %v554 = vpop.xlane.xlu0 %553
          %vm555 = vcmask 123904
          %v556 = vsel %vm555, %v550, 0.0
          %557 = vadd.xlane.f32.xlu0 %v556
          %v558 = vpop.xlane.xlu0 %557
          %v559 = vadd.f32 %v547, %v554
          %v560 = vadd.f32 %v548, %v558
          %vm561 = vcmask 7168
          %562 = vst.msk [vmem:[#allocation4] sm:$0xff] %vm561, %v559
          %vm563 = vcmask 1024
          %564 = vst.msk [vmem:[#allocation4 + $0x8] sm:$0x3] %vm563, %v560
          %v565 = vld [vmem:[#allocation5] sm:$0xff]
          %v566 = vld [vmem:[#allocation5 + $0x8] sm:$0x3]
          %v568 = vsel %vm551, %v544, 0
          %v571 = vsel %vm551, %v546, 0
          %573 = vmatprep.subr.mxu0 0.0
          %574 = vmatpush1.msra.mxu0 0.0
          %575 = vmatprep.subr.mxu0 0.0
          %576 = vmatpush1.msra.mxu0 0.0
          %577 = vmatprep.subr.mxu0 0.0
          %578 = vmatpush1.msra.mxu0 0.0
          %579 = vmatprep.subr.mxu0 0.0
          %580 = vmatpush1.msra.mxu0 0.0
          %581 = vmatprep.subr.mxu0 0.0
          %582 = vmatpush1.msra.mxu0 0.0
          %583 = vmatprep.subr.mxu0 0.0
          %584 = vmatpush1.msra.mxu0 0.0
          %585 = vmatprep.subr.mxu0 0.0
          %586 = vmatpush1.msra.mxu0 0.0
          %587 = vmatprep.subr.mxu0 0.0
          %588 = vmatpush1.msra.mxu0 0.0
          %589 = vmatprep.subr.mxu0 0.0
          %590 = vmatpush1.msra.mxu0 0.0
          %591 = vmatprep.subr.mxu0 0.0
          %592 = vmatpush1.msra.mxu0 0.0
          %593 = vmatprep.subr.mxu0 0.0
          %594 = vmatpush1.msra.mxu0 0.0
          %595 = vmatprep.subr.mxu0 0.0
          %596 = vmatpush1.msra.mxu0 0.0
          %597 = vmatprep.subr.mxu0 0.0
          %598 = vmatpush1.msra.mxu0 0.0
          %599 = vmatprep.subr.mxu0 0.0
          %600 = vmatpush1.msra.mxu0 0.0
          %601 = vmatprep.subr.mxu0 0.0
          %602 = vmatpush1.msra.mxu0 %v329
          %603 = vmatprep.subr.mxu0 0.0
          %604 = vmatpush1.msra.mxu0 %v327
          %605 = vmatprep.subr.mxu0 0.0
          %606 = vmatpush2.msra.mxu0 0.0
          %607 = vmatprep.subr.mxu0 0.0
          %608 = vmatpush2.msra.mxu0 0.0
          %609 = vmatprep.subr.mxu0 0.0
          %610 = vmatpush2.msra.mxu0 0.0
          %611 = vmatprep.subr.mxu0 0.0
          %612 = vmatpush2.msra.mxu0 0.0
          %613 = vmatprep.subr.mxu0 0.0
          %614 = vmatpush2.msra.mxu0 0.0
          %615 = vmatprep.subr.mxu0 0.0
          %616 = vmatpush2.msra.mxu0 0.0
          %617 = vmatprep.subr.mxu0 0.0
          %618 = vmatpush2.msra.mxu0 0.0
          %619 = vmatprep.subr.mxu0 0.0
          %620 = vmatpush2.msra.mxu0 0.0
          %621 = vmatprep.subr.mxu0 0.0
          %622 = vmatpush2.msra.mxu0 0.0
          %623 = vmatprep.subr.mxu0 0.0
          %624 = vmatpush2.msra.mxu0 0.0
          %625 = vmatprep.subr.mxu0 0.0
          %626 = vmatpush2.msra.mxu0 0.0
          %627 = vmatprep.subr.mxu0 0.0
          %628 = vmatpush2.msra.mxu0 0.0
          %629 = vmatprep.subr.mxu0 0.0
          %630 = vmatpush2.msra.mxu0 0.0
          %631 = vmatprep.subr.mxu0 0.0
          %632 = vmatpush2.msra.mxu0 0.0
          %633 = vmatprep.subr.mxu0 0.0
          %634 = vmatpush2.msra.mxu0 0.0
          %635 = vmatprep.subr.mxu0 0.0
          %636 = vmatpush2.msra.mxu0 0.0
          %637 = vmatprep.mubr.f32.mxu0 0.0
          %638 = vmatmul.mubr.f32.gmra.mxu0 %v568
          %v639 = vpop.f32.mrf.mxu0
          %v640 = vadd.f32 0.0, %v639
          %v641 = vpop.f32.mrf.mxu0
          %642 = vmatprep.mubr.f32.mxu0 0.0
          %643 = vmatmul.mubr.f32.gmra.mxu0 %v571
          %v644 = vpop.f32.mrf.mxu0
          %v645 = vadd.f32 0.0, %v644
          %v646 = vpop.f32.mrf.mxu0
          %647 = vdwg.mxu0
          %v648 = vadd.f32 %v565, %v640
          %v649 = vadd.f32 %v566, %v645
          %650 = vst.msk [vmem:[#allocation5] sm:$0xff] %vm303, %v648
          %vm651 = vcmask 254976
          %652 = vst.msk [vmem:[#allocation5 + $0x8] sm:$0x3] %vm651, %v649
        $region76: #{memory_module_forward.2} parent=43 // pred_fallthru
          _
        // Predicated region
        $region77: #{memory_module_forward.2} parent=43 // pred_check
          _
        $region78: #{memory_module_forward.2} parent=43 // pred_check_branch
          %654 = sbr.rel (%p485) target = $region80
        $region79: #{memory_module_forward.2} parent=43 // pred_region
          %v655 = vld [vmem:[#allocation5] sm:$0xff]
          %v656 = vld [vmem:[#allocation5 + $0x8] sm:$0x3]
          %v657 = vld [vmem:[#allocation4] sm:$0xff]
          %v658 = vld [vmem:[#allocation4 + $0x8] sm:$0x3]
          %v659 = vmax.f32 %v657, 1e-12
          %v660 = vmax.f32 %v658, 1e-12
          %662 = vset.pattern.permute.xlu0 0
          %663 = vperm.xlu0 %662, %v659
          %v664 = vpop.permute.xlu0 %663
          %667 = vset.pattern.permute.xlu0 0
          %668 = vperm.xlu0 %667, %v660
          %v669 = vpop.permute.xlu0 %668
          %v671 = vrcp.pop %v664
          %v672 = vmul.f32 %v655, %v671
          %v673 = vrcp.pop %v669
          %v674 = vmul.f32 %v656, %v673
          %v675 = vld [vmem:[#allocation10] sm:$0xff]
          %v676 = vld [vmem:[#allocation10 + $0x8] sm:$0xff]
          %v677 = vld [vmem:[#allocation10 + $0x10] sm:$0xff]
          %v678 = vld [vmem:[#allocation10 + $0x18] sm:$0xff]
          %v679 = vld [vmem:[%s3] sm:$0x1]
          %v681 = vlaneseq
          %v682 = vshrl.u32 %v681, 7
          %v683 = vsub.s32 0, %v682
          %v684 = vrot.slane %v679, %v683
          %v687 = vsel %vm303, %v675, 0
          %v690 = vsel %vm303, %v676, 0
          %v693 = vsel %vm303, %v677, 0
          %v696 = vsel %vm303, %v678, 0
          %698 = vmatprep.subr.mxu0 0.0
          %699 = vmatpush1.xpose.msra.mxu0 0.0
          %700 = vmatprep.subr.mxu0 0.0
          %701 = vmatpush1.xpose.msra.mxu0 0.0
          %702 = vmatprep.subr.mxu0 0.0
          %703 = vmatpush1.xpose.msra.mxu0 0.0
          %704 = vmatprep.subr.mxu0 0.0
          %705 = vmatpush1.xpose.msra.mxu0 0.0
          %706 = vmatprep.subr.mxu0 0.0
          %707 = vmatpush1.xpose.msra.mxu0 0.0
          %708 = vmatprep.subr.mxu0 0.0
          %709 = vmatpush1.xpose.msra.mxu0 0.0
          %710 = vmatprep.subr.mxu0 0.0
          %711 = vmatpush1.xpose.msra.mxu0 0.0
          %712 = vmatprep.subr.mxu0 0.0
          %713 = vmatpush1.xpose.msra.mxu0 0.0
          %714 = vmatprep.subr.mxu0 0.0
          %715 = vmatpush1.xpose.msra.mxu0 0.0
          %716 = vmatprep.subr.mxu0 0.0
          %717 = vmatpush1.xpose.msra.mxu0 0.0
          %718 = vmatprep.subr.mxu0 0.0
          %719 = vmatpush1.xpose.msra.mxu0 0.0
          %720 = vmatprep.subr.mxu0 0.0
          %721 = vmatpush1.xpose.msra.mxu0 0.0
          %722 = vmatprep.subr.mxu0 0.0
          %723 = vmatpush1.xpose.msra.mxu0 %v696
          %724 = vmatprep.subr.mxu0 0.0
          %725 = vmatpush1.xpose.msra.mxu0 %v693
          %726 = vmatprep.subr.mxu0 0.0
          %727 = vmatpush1.xpose.msra.mxu0 %v690
          %728 = vmatprep.subr.mxu0 0.0
          %729 = vmatpush1.xpose.msra.mxu0 %v687
          %730 = vmatprep.subr.mxu0 0.0
          %731 = vmatpush2.xpose.msra.mxu0 0.0
          %732 = vmatprep.subr.mxu0 0.0
          %733 = vmatpush2.xpose.msra.mxu0 0.0
          %734 = vmatprep.subr.mxu0 0.0
          %735 = vmatpush2.xpose.msra.mxu0 0.0
          %736 = vmatprep.subr.mxu0 0.0
          %737 = vmatpush2.xpose.msra.mxu0 0.0
          %738 = vmatprep.subr.mxu0 0.0
          %739 = vmatpush2.xpose.msra.mxu0 0.0
          %740 = vmatprep.subr.mxu0 0.0
          %741 = vmatpush2.xpose.msra.mxu0 0.0
          %742 = vmatprep.subr.mxu0 0.0
          %743 = vmatpush2.xpose.msra.mxu0 0.0
          %744 = vmatprep.subr.mxu0 0.0
          %745 = vmatpush2.xpose.msra.mxu0 0.0
          %746 = vmatprep.subr.mxu0 0.0
          %747 = vmatpush2.xpose.msra.mxu0 0.0
          %748 = vmatprep.subr.mxu0 0.0
          %749 = vmatpush2.xpose.msra.mxu0 0.0
          %750 = vmatprep.subr.mxu0 0.0
          %751 = vmatpush2.xpose.msra.mxu0 0.0
          %752 = vmatprep.subr.mxu0 0.0
          %753 = vmatpush2.xpose.msra.mxu0 0.0
          %754 = vmatprep.subr.mxu0 0.0
          %755 = vmatpush2.xpose.msra.mxu0 0.0
          %756 = vmatprep.subr.mxu0 0.0
          %757 = vmatpush2.xpose.msra.mxu0 0.0
          %758 = vmatprep.subr.mxu0 0.0
          %759 = vmatpush2.xpose.msra.mxu0 0.0
          %760 = vmatprep.subr.mxu0 0.0
          %761 = vmatpush2.xpose.msra.mxu0 0.0
          %762 = vmatprep.mubr.f32.mxu0 0.0
          %763 = vmatmul.mubr.f32.gmra.mxu0 %v331
          %v764 = vpop.f32.mrf.mxu0
          %v765 = vadd.f32 %v684, %v764
          %v766 = vpop.f32.mrf.mxu0
          %767 = vmatprep.mubr.f32.mxu0 0.0
          %768 = vmatmul.mubr.f32.gmra.mxu0 %v334
          %v769 = vpop.f32.mrf.mxu0
          %v770 = vadd.f32 %v684, %v769
          %v771 = vpop.f32.mrf.mxu0
          %772 = vdwg.mxu0
          %v773 = vld [vmem:[#allocation11] sm:$0xff]
          %v774 = vld [vmem:[#allocation11 + $0x8] sm:$0xff]
          %v775 = vld [vmem:[#allocation11 + $0x10] sm:$0xff]
          %v776 = vld [vmem:[#allocation11 + $0x18] sm:$0xff]
          %v777 = vld [vmem:[%s5] sm:$0x1]
          %v779 = vlaneseq
          %v780 = vshrl.u32 %v779, 7
          %v781 = vsub.s32 0, %v780
          %v782 = vrot.slane %v777, %v781
          %v785 = vsel %vm303, %v672, 0
          %v788 = vsel %vm303, %v674, 0
          %v791 = vsel %vm303, %v773, 0
          %v794 = vsel %vm303, %v774, 0
          %v797 = vsel %vm303, %v775, 0
          %v800 = vsel %vm303, %v776, 0
          %802 = vmatprep.subr.mxu0 0.0
          %803 = vmatpush1.xpose.msra.mxu0 0.0
          %804 = vmatprep.subr.mxu0 0.0
          %805 = vmatpush1.xpose.msra.mxu0 0.0
          %806 = vmatprep.subr.mxu0 0.0
          %807 = vmatpush1.xpose.msra.mxu0 0.0
          %808 = vmatprep.subr.mxu0 0.0
          %809 = vmatpush1.xpose.msra.mxu0 0.0
          %810 = vmatprep.subr.mxu0 0.0
          %811 = vmatpush1.xpose.msra.mxu0 0.0
          %812 = vmatprep.subr.mxu0 0.0
          %813 = vmatpush1.xpose.msra.mxu0 0.0
          %814 = vmatprep.subr.mxu0 0.0
          %815 = vmatpush1.xpose.msra.mxu0 0.0
          %816 = vmatprep.subr.mxu0 0.0
          %817 = vmatpush1.xpose.msra.mxu0 0.0
          %818 = vmatprep.subr.mxu0 0.0
          %819 = vmatpush1.xpose.msra.mxu0 0.0
          %820 = vmatprep.subr.mxu0 0.0
          %821 = vmatpush1.xpose.msra.mxu0 0.0
          %822 = vmatprep.subr.mxu0 0.0
          %823 = vmatpush1.xpose.msra.mxu0 0.0
          %824 = vmatprep.subr.mxu0 0.0
          %825 = vmatpush1.xpose.msra.mxu0 0.0
          %826 = vmatprep.subr.mxu0 0.0
          %827 = vmatpush1.xpose.msra.mxu0 %v800
          %828 = vmatprep.subr.mxu0 0.0
          %829 = vmatpush1.xpose.msra.mxu0 %v797
          %830 = vmatprep.subr.mxu0 0.0
          %831 = vmatpush1.xpose.msra.mxu0 %v794
          %832 = vmatprep.subr.mxu0 0.0
          %833 = vmatpush1.xpose.msra.mxu0 %v791
          %834 = vmatprep.subr.mxu0 0.0
          %835 = vmatpush2.xpose.msra.mxu0 0.0
          %836 = vmatprep.subr.mxu0 0.0
          %837 = vmatpush2.xpose.msra.mxu0 0.0
          %838 = vmatprep.subr.mxu0 0.0
          %839 = vmatpush2.xpose.msra.mxu0 0.0
          %840 = vmatprep.subr.mxu0 0.0
          %841 = vmatpush2.xpose.msra.mxu0 0.0
          %842 = vmatprep.subr.mxu0 0.0
          %843 = vmatpush2.xpose.msra.mxu0 0.0
          %844 = vmatprep.subr.mxu0 0.0
          %845 = vmatpush2.xpose.msra.mxu0 0.0
          %846 = vmatprep.subr.mxu0 0.0
          %847 = vmatpush2.xpose.msra.mxu0 0.0
          %848 = vmatprep.subr.mxu0 0.0
          %849 = vmatpush2.xpose.msra.mxu0 0.0
          %850 = vmatprep.subr.mxu0 0.0
          %851 = vmatpush2.xpose.msra.mxu0 0.0
          %852 = vmatprep.subr.mxu0 0.0
          %853 = vmatpush2.xpose.msra.mxu0 0.0
          %854 = vmatprep.subr.mxu0 0.0
          %855 = vmatpush2.xpose.msra.mxu0 0.0
          %856 = vmatprep.subr.mxu0 0.0
          %857 = vmatpush2.xpose.msra.mxu0 0.0
          %858 = vmatprep.subr.mxu0 0.0
          %859 = vmatpush2.xpose.msra.mxu0 0.0
          %860 = vmatprep.subr.mxu0 0.0
          %861 = vmatpush2.xpose.msra.mxu0 0.0
          %862 = vmatprep.subr.mxu0 0.0
          %863 = vmatpush2.xpose.msra.mxu0 0.0
          %864 = vmatprep.subr.mxu0 0.0
          %865 = vmatpush2.xpose.msra.mxu0 0.0
          %866 = vmatprep.mubr.f32.mxu0 0.0
          %867 = vmatmul.mubr.f32.gmra.mxu0 %v785
          %v868 = vpop.f32.mrf.mxu0
          %v869 = vadd.f32 %v782, %v868
          %v870 = vpop.f32.mrf.mxu0
          %871 = vmatprep.mubr.f32.mxu0 0.0
          %872 = vmatmul.mubr.f32.gmra.mxu0 %v788
          %v873 = vpop.f32.mrf.mxu0
          %v874 = vadd.f32 %v782, %v873
          %v875 = vpop.f32.mrf.mxu0
          %876 = vdwg.mxu0
          %v877 = vadd.f32 %v765, %v869
          %v878 = vadd.f32 %v770, %v874
          %v879 = vxor.u32 %v877, 2147483648
          %v880 = vxor.u32 %v878, 2147483648
          %v881 = vmul.f32 %v879, 1.442695
          %v882 = vpow.pop %v881
          %v883 = vmul.f32 %v880, 1.442695
          %v884 = vpow.pop %v883
          %v885 = vadd.f32 %v882, 1.0
          %v886 = vadd.f32 %v884, 1.0
          %v887 = vrcp.pop %v885
          %v888 = vmul.f32 1.0, %v887
          %v889 = vrcp.pop %v886
          %v890 = vmul.f32 1.0, %v889
          %v891 = vsub.f32 1.0, %v888
          %v892 = vsub.f32 1.0, %v890
          %v893 = vmul.f32 %v891, %v297
          %v894 = vmul.f32 %v892, %v298
          %v895 = vmul.f32 %v888, %v672
          %v896 = vmul.f32 %v890, %v674
          %v897 = vadd.f32 %v893, %v895
          %v898 = vadd.f32 %v894, %v896
          %899 = vst.msk [vmem:[%s6] sm:$0xff] %vm303, %v897
          %vm900 = vcmask 254976
          %901 = vst.msk [vmem:[%s6 + $0x8] sm:$0x3] %vm900, %v898
        $region80: #{memory_module_forward.2} parent=43 // pred_fallthru
          _
        // Predicated region
        $region81: #{memory_module_forward.2} parent=43 // pred_check
          %p902 = pneg %p176
        $region82: #{memory_module_forward.2} parent=43 // pred_check_branch
          %904 = sbr.rel (%p902) target = $region84
        $region83: #{memory_module_forward.2} parent=43 // pred_region
          _
        $region84: #{memory_module_forward.2} parent=43 // pred_fallthru
          _
        // Predicated region
        $region85: #{memory_module_forward.2} parent=43 // pred_check
          %p905 = pneg %p176
        $region86: #{memory_module_forward.2} parent=43 // pred_check_branch
          %907 = sbr.rel (%p905) target = $region88
        $region87: #{memory_module_forward.2} parent=43 // pred_region
          _
        $region88: #{memory_module_forward.2} parent=43 // pred_fallthru
          _
      $region44: #{memory_module_forward.2} parent=5 // pred_fallthru
        _
      %p908 = scmp.le.s32.totalorder 2, %s15
      // Predicated region
      $region89: #{memory_module_forward.2} parent=5 // pred_check
        %p909 = pneg %p908
      $region90: #{memory_module_forward.2} parent=5 // pred_check_branch
        %911 = sbr.rel (%p909) target = $region92
      $region91: #{memory_module_forward.2} parent=5 // pred_region
        %s912 = ssub.s32 %s15, 2
      $region92: #{memory_module_forward.2} parent=5 // pred_fallthru
        _
    $region6: #{memory_module_forward.2} parent=1 // loop_footer
      %s19 = sadd.s32 1, %s15
    $region7: #{memory_module_forward.2} parent=1 // loop_footer_branch
      %14 = sbr.rel target = $region3
    $region8: #{memory_module_forward.2} parent=1 // loop_exit
      _
    %913 = vsyncpa [#allocation7], 1
    %s914 = scalar_lea.sflag [#allocation7], 1
    %915 = vsyncpa %s914, 1
    %916 = vsyncpa [#allocation9], 1
    %917 = vsyncpa [#allocation12], 1

</llo_original>
